<compile_context>
chip_gen: v7x
topology: tpu7x:2x2x1
jax: 0.10.0
libtpu: 0.0.40
codegen_flags: <defaults>
</compile_context>

<pallas_src>
import functools

import jax
import jax.numpy as jnp
from jax.experimental import pallas as pl
from jax.experimental.pallas import tpu as pltpu

LANE = 128         # TPU lane width: every feature dim is padded to this
NODE_ALIGN = 128   # node-count padding (adjacency last dim == matmul K dim)
SUBLANE = 8


def _round_up(v, m):
    return (v + m - 1) // m * m


def _vmem_limit_bytes():
    """Generation-aware VMEM cap (~3/4 of physical, <= 100 MiB)."""
    try:
        cap = int(pltpu.get_tpu_info().vmem_capacity_bytes)
    except Exception:
        cap = 64 * 1024 * 1024        # conservative default (v7x per-TC)
    return min((cap * 3) // 4, 100 * 1024 * 1024)


# ----------------------------- fused Pallas kernel -----------------------------

def _fused_hybrid_kernel(x_ref, am_ref, ah_ref, w_ref, b_ref, o_ref,
                         *, layer_types, out_channels):
    """All conv layers + ReLU + log_softmax in one kernel.

      x_ref  : [Np, 128]       bf16  lane-padded node features
      am_ref : [Np, Np]        bf16  row-normalized adjacency (SAGE mean aggr)
      ah_ref : [Np, Np]        bf16  sym-normalized adjacency + self loops (GCN)
      w_ref  : [2L, 128, 128]  bf16  per layer: slot 2l = W_l (SAGE) / W (GCN),
                                     slot 2l+1 = W_r (SAGE) / zeros (GCN, unused)
      b_ref  : [8, 128]        f32   row l = layer-l bias (lane-padded)
      o_ref  : [Np, 128]       f32   log_softmax over the first out_channels lanes
    """
    a_mean = am_ref[...]           # bf16, stays resident in VMEM/vregs
    a_hat = ah_ref[...]            # bf16
    x = x_ref[...]                 # bf16 activations carried between layers

    n_layers = len(layer_types)
    out = None
    for li, kind in enumerate(layer_types):
        w0 = w_ref[2 * li]                       # [128, 128] bf16
        b = b_ref[pl.ds(li, 1), :]               # [1, 128]   f32
        # shared first weight matmul (f32 accumulation on the MXU)
        xw = jnp.dot(x, w0, preferred_element_type=jnp.float32)
        if kind == "sage":
            # PyG SAGEConv (mean aggr): out = lin_l(mean_j x_j) + lin_r(x_i) + b
            # algebraic form: A_mean @ (x @ W_l) + x @ W_r + b   (no concat copy)
            w1 = w_ref[2 * li + 1]
            out = (jnp.dot(a_mean, xw.astype(jnp.bfloat16),
                           preferred_element_type=jnp.float32)
                   + jnp.dot(x, w1, preferred_element_type=jnp.float32)
                   + b)
        else:  # gcn
            # PyG GCNConv: out = D^-1/2 (A+I) D^-1/2 @ (x @ W) + b
            out = jnp.dot(a_hat, xw.astype(jnp.bfloat16),
                          preferred_element_type=jnp.float32) + b
        if li != n_layers - 1:
            # ReLU in f32, then a single cast back to the bf16 activation carry.
            x = jnp.maximum(out, 0.0).astype(jnp.bfloat16)
            # TODO(synk): F.dropout is identity at inference (training=False);
            # training-mode dropout would use pltpu.prng_seed/prng_random_bits.

    # log_softmax over dim=1, restricted to the real (unpadded) output lanes.
    lane = jax.lax.broadcasted_iota(jnp.int32, out.shape, 1)
    valid = lane < out_channels
    xm = jnp.where(valid, out, jnp.float32(-1e30))
    m = jnp.max(xm, axis=-1, keepdims=True)
    z = xm - m
    lse = jnp.log(jnp.sum(jnp.exp(z), axis=-1, keepdims=True))
    o_ref[...] = jnp.where(valid, z - lse, 0.0)


# ------------------------------ fused forward ------------------------------

def hybrid_forward(x, a_mean, a_hat, params, out_channels, dropout_p=0.5):
    """One pallas_call for the full layer stack + log_softmax."""
    n, c_in0 = x.shape
    n_pad = _round_up(max(n, 1), NODE_ALIGN)
    n_layers = len(params)

    # ---- pad & pack operands (plain-JAX glue, not the hot path) ----
    x_pad = (jnp.zeros((n_pad, LANE), jnp.bfloat16)
             .at[:n, :c_in0].set(x.astype(jnp.bfloat16)))
    am_pad = (jnp.zeros((n_pad, n_pad), jnp.float32).at[:n, :n].set(a_mean)
              .astype(jnp.bfloat16))
    ah_pad = (jnp.zeros((n_pad, n_pad), jnp.float32).at[:n, :n].set(a_hat)
              .astype(jnp.bfloat16))

    # Pack all layer weights / biases into single arrays (2 DMAs, not 2L).
    w_stack = jnp.zeros((2 * n_layers, LANE, LANE), jnp.float32)
    b_stack = jnp.zeros((_round_up(n_layers, SUBLANE), LANE), jnp.float32)
    layer_types = []
    for li, p in enumerate(params):
        c_out = p["b"].shape[-1]
        if p["type"] == "sage":
            c_in = p["w_l"].shape[0]
            w_stack = w_stack.at[2 * li, :c_in, :c_out].set(p["w_l"])
            w_stack = w_stack.at[2 * li + 1, :c_in, :c_out].set(p["w_r"])
        else:
            c_in = p["w"].shape[0]
            w_stack = w_stack.at[2 * li, :c_in, :c_out].set(p["w"])
        b_stack = b_stack.at[li, :c_out].set(p["b"])
        layer_types.append(p["type"])
    w_stack = w_stack.astype(jnp.bfloat16)

    # ---- cost estimate (adjacency dots dominate: O(Np^2 * 128) per layer) ----
    flops = 0
    for t in layer_types:
        flops += 2 * n_pad * n_pad * LANE            # A @ (x @ W0)
        flops += 2 * n_pad * LANE * LANE             # x @ W0
        if t == "sage":
            flops += 2 * n_pad * LANE * LANE         # x @ W1
    bytes_accessed = (2 * n_pad * n_pad * 2          # adjacencies (bf16)
                      + n_pad * LANE * 2             # x in (bf16)
                      + w_stack.size * 2 + b_stack.size * 4
                      + n_pad * LANE * 4)            # out (f32)
    cost = pl.CostEstimate(flops=flops,
                           transcendentals=n_pad * LANE,   # exp in log_softmax
                           bytes_accessed=bytes_accessed)

    vmem = pl.BlockSpec(memory_space=pltpu.MemorySpace.VMEM)
    out = pl.pallas_call(
        functools.partial(_fused_hybrid_kernel,
                          layer_types=tuple(layer_types),
                          out_channels=out_channels),
        out_shape=jax.ShapeDtypeStruct((n_pad, LANE), jnp.float32),
        in_specs=[vmem] * 5,
        out_specs=vmem,
        compiler_params=pltpu.CompilerParams(
            vmem_limit_bytes=_vmem_limit_bytes(),
        ),
        cost_estimate=cost,
    )(x_pad, am_pad, ah_pad, w_stack, b_stack)
    # NB: padded rows [n:n_pad] hold bias-only garbage; always slice here.
    return out[:n, :out_channels]


# -------------------------------- glue (JAX) -------------------------------

def build_adjacency(edge_index, num_nodes):
    """Dense aggregation operators from edge_index [2, E] (src -> dst).

    A[dst, src] = multiplicity of edge src->dst, so row sums are in-degrees,
    i.e. PyG's degree over edge_index[1] (destinations) — matching both
    SAGEConv mean aggregation and GCNConv's gcn_norm for directed graphs.
    """
    src, dst = edge_index[0], edge_index[1]
    a = jnp.zeros((num_nodes, num_nodes), jnp.float32).at[dst, src].add(1.0)
    # SAGE mean aggregation: row-normalize by in-degree (0-neighbor rows -> 0)
    deg = jnp.sum(a, axis=1, keepdims=True)
    a_mean = a / jnp.maximum(deg, 1.0)
    # GCN: add self loops + symmetric normalization
    a_loop = a + jnp.eye(num_nodes, dtype=jnp.float32)
    deg_hat = jnp.sum(a_loop, axis=1)
    dinv = 1.0 / jnp.sqrt(deg_hat)
    a_hat = a_loop * dinv[:, None] * dinv[None, :]
    return a_mean, a_hat


def _glorot(key, c_in, c_out):
    scale = jnp.sqrt(2.0 / (c_in + c_out)).astype(jnp.float32)
    return scale * jax.random.normal(key, (c_in, c_out), jnp.float32)


def init_params(key, in_channels, hidden_channels, out_channels, num_layers):
    """Layer stack: SAGE(in,h), GCN(h,h), (num_layers-3) x SAGE(h,h), SAGE(h,out)."""
    dims = [(in_channels, hidden_channels), (hidden_channels, hidden_channels)]
    dims += [(hidden_channels, hidden_channels)] * (num_layers - 3)
    dims += [(hidden_channels, out_channels)]
    types = ["sage", "gcn"] + ["sage"] * (num_layers - 3) + ["sage"]

    params = []
    for (c_in, c_out), t in zip(dims, types):
        key, k1, k2 = jax.random.split(key, 3)
        if t == "sage":
            params.append(dict(
                type="sage",
                w_l=_glorot(k1, c_in, c_out),
                w_r=_glorot(k2, c_in, c_out),
                b=jnp.zeros((c_out,), jnp.float32),
            ))
        else:
            params.append(dict(
                type="gcn",
                w=_glorot(k1, c_in, c_out),
                b=jnp.zeros((c_out,), jnp.float32),
            ))
    return params


def hybrid_forward_ref(x, a_mean, a_hat, params):
    """Pure-JAX reference mirroring the kernel arithmetic
    (bf16 operands & activation carry, f32 accumulation)."""
    am = a_mean.astype(jnp.bfloat16)
    ah = a_hat.astype(jnp.bfloat16)
    xb = x.astype(jnp.bfloat16)
    n_layers = len(params)
    out = None
    for i, p in enumerate(params):
        if p["type"] == "sage":
            xw = jnp.dot(xb, p["w_l"].astype(jnp.bfloat16),
                         preferred_element_type=jnp.float32)
            out = (jnp.dot(am, xw.astype(jnp.bfloat16),
                           preferred_element_type=jnp.float32)
                   + jnp.dot(xb, p["w_r"].astype(jnp.bfloat16),
                             preferred_element_type=jnp.float32)
                   + p["b"])
        else:
            xw = jnp.dot(xb, p["w"].astype(jnp.bfloat16),
                         preferred_element_type=jnp.float32)
            out = jnp.dot(ah, xw.astype(jnp.bfloat16),
                          preferred_element_type=jnp.float32) + p["b"]
        if i != n_layers - 1:
            xb = jnp.maximum(out, 0.0).astype(jnp.bfloat16)
    return jax.nn.log_softmax(out, axis=1)


# ----------------------------------- main -----------------------------------

if __name__ == "__main__":
    key = jax.random.PRNGKey(0)

    num_nodes = 16
    num_edges = 48
    in_channels, hidden_channels, out_channels = 4, 32, 8
    num_layers = 4
    dropout = 0.5

    key, kx, ke, kp = jax.random.split(key, 4)
    x = jax.random.normal(kx, (num_nodes, in_channels), jnp.float32)
    edge_index = jax.random.randint(ke, (2, num_edges), 0, num_nodes, jnp.int32)

    a_mean, a_hat = build_adjacency(edge_index, num_nodes)
    params = init_params(kp, in_channels, hidden_channels, out_channels, num_layers)

    out = hybrid_forward(x, a_mean, a_hat, params, out_channels, dropout_p=dropout)
    out = jax.block_until_ready(out)

    assert out.shape == (num_nodes, out_channels)
    assert bool(jnp.all(jnp.isfinite(out)))
    # log_softmax rows must sum to ~1 in prob space
    assert bool(jnp.allclose(jnp.sum(jnp.exp(out), axis=1), 1.0, atol=1e-4))
    # match the plain-JAX reference of the same (bf16-operand) arithmetic
    ref = hybrid_forward_ref(x, a_mean, a_hat, params)
    assert bool(jnp.allclose(out, ref, atol=1e-2, rtol=1e-2))

    print("KERNEL_OK")
</pallas_src>

<mosaic_0001>
module attributes {stable_mosaic.version = 11 : i64} {
  func.func @_fused_hybrid_kernel(%arg0: memref<128x128xbf16, #tpu.memory_space<vmem>>, %arg1: memref<128x128xbf16, #tpu.memory_space<vmem>>, %arg2: memref<128x128xbf16, #tpu.memory_space<vmem>>, %arg3: memref<8x128x128xbf16, #tpu.memory_space<vmem>>, %arg4: memref<8x128xf32, #tpu.memory_space<vmem>>, %arg5: memref<128x128xf32, #tpu.memory_space<vmem>>) attributes {dimension_semantics = [], scalar_prefetch = 0 : i64, scratch_operands = 0 : i64, tpu.core_type = #tpu.core_type<tc>} {
    %c0 = arith.constant 0 : index
    %c0_0 = arith.constant 0 : index
    %0 = vector.load %arg1[%c0, %c0_0] : memref<128x128xbf16, #tpu.memory_space<vmem>>, vector<128x128xbf16>
    %c0_1 = arith.constant 0 : index
    %c0_2 = arith.constant 0 : index
    %1 = vector.load %arg2[%c0_1, %c0_2] : memref<128x128xbf16, #tpu.memory_space<vmem>>, vector<128x128xbf16>
    %c0_3 = arith.constant 0 : index
    %c0_4 = arith.constant 0 : index
    %2 = vector.load %arg0[%c0_3, %c0_4] : memref<128x128xbf16, #tpu.memory_space<vmem>>, vector<128x128xbf16>
    %c0_5 = arith.constant 0 : index
    %c0_6 = arith.constant 0 : index
    %c0_7 = arith.constant 0 : index
    %3 = vector.load %arg3[%c0_5, %c0_6, %c0_7] : memref<8x128x128xbf16, #tpu.memory_space<vmem>>, vector<1x128x128xbf16>
    %4 = vector.shape_cast %3 : vector<1x128x128xbf16> to vector<128x128xbf16>
    %c0_8 = arith.constant 0 : index
    %c0_9 = arith.constant 0 : index
    %5 = vector.load %arg4[%c0_8, %c0_9] : memref<8x128xf32, #tpu.memory_space<vmem>>, vector<1x128xf32>
    %cst = arith.constant dense<0.000000e+00> : vector<128x128xf32>
    %6 = tpu.matmul %2, %4, %cst {dimension_numbers = #tpu.dot_dimension_numbers<[1], [0], [0], [1], [0, 0, 1, 1], [], []>} : vector<128x128xbf16>, vector<128x128xbf16>, vector<128x128xf32> -> vector<128x128xf32>
    %c1 = arith.constant 1 : index
    %c0_10 = arith.constant 0 : index
    %c0_11 = arith.constant 0 : index
    %7 = vector.load %arg3[%c1, %c0_10, %c0_11] : memref<8x128x128xbf16, #tpu.memory_space<vmem>>, vector<1x128x128xbf16>
    %8 = vector.shape_cast %7 : vector<1x128x128xbf16> to vector<128x128xbf16>
    %9 = arith.truncf %6 : vector<128x128xf32> to vector<128x128xbf16>
    %cst_12 = arith.constant dense<0.000000e+00> : vector<128x128xf32>
    %10 = tpu.matmul %0, %9, %cst_12 {dimension_numbers = #tpu.dot_dimension_numbers<[1], [0], [0], [1], [0, 0, 1, 1], [], []>} : vector<128x128xbf16>, vector<128x128xbf16>, vector<128x128xf32> -> vector<128x128xf32>
    %cst_13 = arith.constant dense<0.000000e+00> : vector<128x128xf32>
    %11 = tpu.matmul %2, %8, %cst_13 {dimension_numbers = #tpu.dot_dimension_numbers<[1], [0], [0], [1], [0, 0, 1, 1], [], []>} : vector<128x128xbf16>, vector<128x128xbf16>, vector<128x128xf32> -> vector<128x128xf32>
    %12 = arith.addf %10, %11 : vector<128x128xf32>
    %13 = vector.broadcast %5 : vector<1x128xf32> to vector<128x128xf32>
    %14 = arith.addf %12, %13 : vector<128x128xf32>
    %cst_14 = arith.constant 0.000000e+00 : f32
    %15 = vector.broadcast %cst_14 : f32 to vector<128x128xf32>
    %16 = arith.maximumf %14, %15 : vector<128x128xf32>
    %17 = arith.truncf %16 : vector<128x128xf32> to vector<128x128xbf16>
    %c2 = arith.constant 2 : index
    %c0_15 = arith.constant 0 : index
    %c0_16 = arith.constant 0 : index
    %18 = vector.load %arg3[%c2, %c0_15, %c0_16] : memref<8x128x128xbf16, #tpu.memory_space<vmem>>, vector<1x128x128xbf16>
    %19 = vector.shape_cast %18 : vector<1x128x128xbf16> to vector<128x128xbf16>
    %c1_17 = arith.constant 1 : index
    %c0_18 = arith.constant 0 : index
    %20 = vector.load %arg4[%c1_17, %c0_18] : memref<8x128xf32, #tpu.memory_space<vmem>>, vector<1x128xf32>
    %cst_19 = arith.constant dense<0.000000e+00> : vector<128x128xf32>
    %21 = tpu.matmul %17, %19, %cst_19 {dimension_numbers = #tpu.dot_dimension_numbers<[1], [0], [0], [1], [0, 0, 1, 1], [], []>} : vector<128x128xbf16>, vector<128x128xbf16>, vector<128x128xf32> -> vector<128x128xf32>
    %22 = arith.truncf %21 : vector<128x128xf32> to vector<128x128xbf16>
    %cst_20 = arith.constant dense<0.000000e+00> : vector<128x128xf32>
    %23 = tpu.matmul %1, %22, %cst_20 {dimension_numbers = #tpu.dot_dimension_numbers<[1], [0], [0], [1], [0, 0, 1, 1], [], []>} : vector<128x128xbf16>, vector<128x128xbf16>, vector<128x128xf32> -> vector<128x128xf32>
    %24 = vector.broadcast %20 : vector<1x128xf32> to vector<128x128xf32>
    %25 = arith.addf %23, %24 : vector<128x128xf32>
    %cst_21 = arith.constant 0.000000e+00 : f32
    %26 = vector.broadcast %cst_21 : f32 to vector<128x128xf32>
    %27 = arith.maximumf %25, %26 : vector<128x128xf32>
    %28 = arith.truncf %27 : vector<128x128xf32> to vector<128x128xbf16>
    %c4 = arith.constant 4 : index
    %c0_22 = arith.constant 0 : index
    %c0_23 = arith.constant 0 : index
    %29 = vector.load %arg3[%c4, %c0_22, %c0_23] : memref<8x128x128xbf16, #tpu.memory_space<vmem>>, vector<1x128x128xbf16>
    %30 = vector.shape_cast %29 : vector<1x128x128xbf16> to vector<128x128xbf16>
    %c2_24 = arith.constant 2 : index
    %c0_25 = arith.constant 0 : index
    %31 = vector.load %arg4[%c2_24, %c0_25] : memref<8x128xf32, #tpu.memory_space<vmem>>, vector<1x128xf32>
    %cst_26 = arith.constant dense<0.000000e+00> : vector<128x128xf32>
    %32 = tpu.matmul %28, %30, %cst_26 {dimension_numbers = #tpu.dot_dimension_numbers<[1], [0], [0], [1], [0, 0, 1, 1], [], []>} : vector<128x128xbf16>, vector<128x128xbf16>, vector<128x128xf32> -> vector<128x128xf32>
    %c5 = arith.constant 5 : index
    %c0_27 = arith.constant 0 : index
    %c0_28 = arith.constant 0 : index
    %33 = vector.load %arg3[%c5, %c0_27, %c0_28] : memref<8x128x128xbf16, #tpu.memory_space<vmem>>, vector<1x128x128xbf16>
    %34 = vector.shape_cast %33 : vector<1x128x128xbf16> to vector<128x128xbf16>
    %35 = arith.truncf %32 : vector<128x128xf32> to vector<128x128xbf16>
    %cst_29 = arith.constant dense<0.000000e+00> : vector<128x128xf32>
    %36 = tpu.matmul %0, %35, %cst_29 {dimension_numbers = #tpu.dot_dimension_numbers<[1], [0], [0], [1], [0, 0, 1, 1], [], []>} : vector<128x128xbf16>, vector<128x128xbf16>, vector<128x128xf32> -> vector<128x128xf32>
    %cst_30 = arith.constant dense<0.000000e+00> : vector<128x128xf32>
    %37 = tpu.matmul %28, %34, %cst_30 {dimension_numbers = #tpu.dot_dimension_numbers<[1], [0], [0], [1], [0, 0, 1, 1], [], []>} : vector<128x128xbf16>, vector<128x128xbf16>, vector<128x128xf32> -> vector<128x128xf32>
    %38 = arith.addf %36, %37 : vector<128x128xf32>
    %39 = vector.broadcast %31 : vector<1x128xf32> to vector<128x128xf32>
    %40 = arith.addf %38, %39 : vector<128x128xf32>
    %cst_31 = arith.constant 0.000000e+00 : f32
    %41 = vector.broadcast %cst_31 : f32 to vector<128x128xf32>
    %42 = arith.maximumf %40, %41 : vector<128x128xf32>
    %43 = arith.truncf %42 : vector<128x128xf32> to vector<128x128xbf16>
    %c6 = arith.constant 6 : index
    %c0_32 = arith.constant 0 : index
    %c0_33 = arith.constant 0 : index
    %44 = vector.load %arg3[%c6, %c0_32, %c0_33] : memref<8x128x128xbf16, #tpu.memory_space<vmem>>, vector<1x128x128xbf16>
    %45 = vector.shape_cast %44 : vector<1x128x128xbf16> to vector<128x128xbf16>
    %c3 = arith.constant 3 : index
    %c0_34 = arith.constant 0 : index
    %46 = vector.load %arg4[%c3, %c0_34] : memref<8x128xf32, #tpu.memory_space<vmem>>, vector<1x128xf32>
    %cst_35 = arith.constant dense<0.000000e+00> : vector<128x128xf32>
    %47 = tpu.matmul %43, %45, %cst_35 {dimension_numbers = #tpu.dot_dimension_numbers<[1], [0], [0], [1], [0, 0, 1, 1], [], []>} : vector<128x128xbf16>, vector<128x128xbf16>, vector<128x128xf32> -> vector<128x128xf32>
    %c7 = arith.constant 7 : index
    %c0_36 = arith.constant 0 : index
    %c0_37 = arith.constant 0 : index
    %48 = vector.load %arg3[%c7, %c0_36, %c0_37] : memref<8x128x128xbf16, #tpu.memory_space<vmem>>, vector<1x128x128xbf16>
    %49 = vector.shape_cast %48 : vector<1x128x128xbf16> to vector<128x128xbf16>
    %50 = arith.truncf %47 : vector<128x128xf32> to vector<128x128xbf16>
    %cst_38 = arith.constant dense<0.000000e+00> : vector<128x128xf32>
    %51 = tpu.matmul %0, %50, %cst_38 {dimension_numbers = #tpu.dot_dimension_numbers<[1], [0], [0], [1], [0, 0, 1, 1], [], []>} : vector<128x128xbf16>, vector<128x128xbf16>, vector<128x128xf32> -> vector<128x128xf32>
    %cst_39 = arith.constant dense<0.000000e+00> : vector<128x128xf32>
    %52 = tpu.matmul %43, %49, %cst_39 {dimension_numbers = #tpu.dot_dimension_numbers<[1], [0], [0], [1], [0, 0, 1, 1], [], []>} : vector<128x128xbf16>, vector<128x128xbf16>, vector<128x128xf32> -> vector<128x128xf32>
    %53 = arith.addf %51, %52 : vector<128x128xf32>
    %54 = vector.broadcast %46 : vector<1x128xf32> to vector<128x128xf32>
    %55 = arith.addf %53, %54 : vector<128x128xf32>
    %56 = tpu.iota {dimensions = array<i32: 1>} : vector<128x128xi32>
    %c8_i32 = arith.constant 8 : i32
    %57 = vector.broadcast %c8_i32 : i32 to vector<128x128xi32>
    %58 = arith.cmpi slt, %56, %57 : vector<128x128xi32>
    %cst_40 = arith.constant -1.000000e+30 : f32
    %59 = vector.broadcast %cst_40 : f32 to vector<128x128xf32>
    %60 = arith.select %58, %55, %59 : vector<128x128xi1>, vector<128x128xf32>
    %cst_41 = arith.constant dense<0xFF800000> : vector<128xf32>
    %61 = vector.multi_reduction <maximumf>, %60, %cst_41 [1] : vector<128x128xf32> to vector<128xf32>
    %62 = vector.shape_cast %61 : vector<128xf32> to vector<128x1xf32>
    %63 = vector.broadcast %62 : vector<128x1xf32> to vector<128x128xf32>
    %64 = arith.subf %60, %63 : vector<128x128xf32>
    %65 = math.exp %64 : vector<128x128xf32>
    %cst_42 = arith.constant dense<0.000000e+00> : vector<128xf32>
    %66 = vector.multi_reduction <add>, %65, %cst_42 [1] : vector<128x128xf32> to vector<128xf32>
    %67 = vector.shape_cast %66 : vector<128xf32> to vector<128x1xf32>
    %68 = math.log %67 : vector<128x1xf32>
    %69 = vector.broadcast %68 : vector<128x1xf32> to vector<128x128xf32>
    %70 = arith.subf %64, %69 : vector<128x128xf32>
    %cst_43 = arith.constant 0.000000e+00 : f32
    %71 = vector.broadcast %cst_43 : f32 to vector<128x128xf32>
    %72 = arith.select %58, %70, %71 : vector<128x128xi1>, vector<128x128xf32>
    %c0_44 = arith.constant 0 : index
    %c0_45 = arith.constant 0 : index
    %73 = vector.load %arg5[%c0_44, %c0_45] : memref<128x128xf32, #tpu.memory_space<vmem>>, vector<128x128xf32>
    tpu.vector_store %arg5[%c0_44, %c0_45], %72 {strides = array<i32>} : memref<128x128xf32, #tpu.memory_space<vmem>>, vector<128x128xf32>,
    return
  }
}

</mosaic_0001>

<llo_original>
// kernel: tpu_custom_call.1
$region0: #{tpu_custom_call.1}
  #allocation0 [shape = 'u32[]', space=smem, size = 0x4, offset = 0x4, fixed_abs, tag = 'smem constant byte address 0x4 - core index']
  #allocation1 [shape = 'u32[144,128]{1,0:T(1,128)}', space=vmem, size = 0x12000, scoped, tag = 'internal scratch']
  %s0 = inlined_call_operand.hbm [shape: bf16[128,128], index: 0, kind: input, shape index: {}]
  %s1 = inlined_call_operand.hbm [shape: bf16[128,128], index: 1, kind: input, shape index: {}]
  %s2 = inlined_call_operand.hbm [shape: bf16[128,128], index: 2, kind: input, shape index: {}]
  %s3 = inlined_call_operand.hbm [shape: bf16[8,128,128], index: 3, kind: input, shape index: {}]
  %s4 = inlined_call_operand.vmem [shape: f32[8,128], index: 4, kind: input, shape index: {}]
  %s5 = inlined_call_operand.hbm [shape: f32[128,128], index: 5, kind: output, shape index: {}]
  %s6 = sld [smem:[#allocation0]]
  $region46: #{tpu_custom_call.1} parent=0
    _
  %s8 = ssub.s32 1, %s6
  %s9 = scalar_select 0, %s8, %s6
  $region1: #{tpu_custom_call.1} parent=0
    #allocation2 [shape = 'u8[32768]{0}', space=vmem, size = 0x8000, scoped, tag = 'input window, operand 0, single buffered']
    #allocation3 [shape = 's32[1]{0}', space=sflag, size = 0x4, scoped, tag = 'scoped memory for tpu_custom_call.1']
    #allocation4 [shape = 's32[1]{0}', space=sflag, size = 0x4, scoped, tag = 'scoped memory for tpu_custom_call.1']
    #allocation5 [shape = 'u8[32768]{0}', space=vmem, size = 0x8000, scoped, tag = 'input window, operand 1, single buffered']
    #allocation6 [shape = 's32[1]{0}', space=sflag, size = 0x4, scoped, tag = 'scoped memory for tpu_custom_call.1']
    #allocation7 [shape = 'u8[32768]{0}', space=vmem, size = 0x8000, scoped, tag = 'input window, operand 2, single buffered']
    #allocation8 [shape = 'u8[262144]{0}', space=vmem, size = 0x40000, scoped, tag = 'input window, operand 3, single buffered']
    #allocation9 [shape = 's32[1]{0}', space=sflag, size = 0x4, scoped, tag = 'scoped memory for tpu_custom_call.1']
    #allocation10 [shape = 'u8[65536]{0}', space=vmem, size = 0x10000, scoped, tag = 'output window, operand 0, single buffered']
    %10 = vsyncpa [#allocation3], 0
    %11 = vsyncpa [#allocation6], 0
    %12 = vsyncpa [#allocation9], 0
    %13 = vsyncpa [#allocation4], 0
    // Predicated region
    $region2: #{tpu_custom_call.1} parent=1 // pred_check
      _
    $region3: #{tpu_custom_call.1} parent=1 // pred_check_branch
      %15 = sbr.rel (0) target = $region5
    $region4: #{tpu_custom_call.1} parent=1 // pred_region
      %s17 = ssub.s32 1024, 1024
      %18 = vsyncadd [#allocation3], %s17
      %s19 = sshll.u32 [#allocation2], 4
      %s20 = int_to_ptr.vmem [resolvable:$true] %s19
      %25 = dma.hbm_to_vmem [thread:$0]  %s0, 1024, %s20, [#allocation3], 64, 64, 4
    $region5: #{tpu_custom_call.1} parent=1 // pred_fallthru
      _
    // Predicated region
    $region6: #{tpu_custom_call.1} parent=1 // pred_check
      _
    $region7: #{tpu_custom_call.1} parent=1 // pred_check_branch
      %27 = sbr.rel (0) target = $region9
    $region8: #{tpu_custom_call.1} parent=1 // pred_region
      %s29 = ssub.s32 1024, 1024
      %30 = vsyncadd [#allocation6], %s29
      %s31 = sshll.u32 [#allocation5], 4
      %s32 = int_to_ptr.vmem [resolvable:$true] %s31
      %37 = dma.hbm_to_vmem [thread:$0]  %s1, 1024, %s32, [#allocation6], 64, 64, 4
    $region9: #{tpu_custom_call.1} parent=1 // pred_fallthru
      _
    // Predicated region
    $region10: #{tpu_custom_call.1} parent=1 // pred_check
      _
    $region11: #{tpu_custom_call.1} parent=1 // pred_check_branch
      %39 = sbr.rel (0) target = $region13
    $region12: #{tpu_custom_call.1} parent=1 // pred_region
      %s41 = ssub.s32 1024, 1024
      %42 = vsyncadd [#allocation6], %s41
      %s43 = sshll.u32 [#allocation7], 4
      %s44 = int_to_ptr.vmem [resolvable:$true] %s43
      %49 = dma.hbm_to_vmem [thread:$0]  %s2, 1024, %s44, [#allocation6], 64, 64, 4
    $region13: #{tpu_custom_call.1} parent=1 // pred_fallthru
      _
    // Predicated region
    $region14: #{tpu_custom_call.1} parent=1 // pred_check
      _
    $region15: #{tpu_custom_call.1} parent=1 // pred_check_branch
      %51 = sbr.rel (0) target = $region17
    $region16: #{tpu_custom_call.1} parent=1 // pred_region
      %s53 = ssub.s32 8192, 8192
      %54 = vsyncadd [#allocation9], %s53
      %s55 = sshll.u32 [#allocation8], 4
      %s56 = int_to_ptr.vmem [resolvable:$true] %s55
      %61 = dma.hbm_to_vmem [thread:$0]  %s3, 8192, %s56, [#allocation9], 64, 64, 4
    $region17: #{tpu_custom_call.1} parent=1 // pred_fallthru
      _
    // Predicated region
    $region18: #{tpu_custom_call.1} parent=1 // pred_check
      _
    $region19: #{tpu_custom_call.1} parent=1 // pred_check_branch
      %63 = sbr.rel (0) target = $region21
    $region20: #{tpu_custom_call.1} parent=1 // pred_region
      _
    $region21: #{tpu_custom_call.1} parent=1 // pred_fallthru
      _
    // Predicated region
    $region22: #{tpu_custom_call.1} parent=1 // pred_check
      _
    $region23: #{tpu_custom_call.1} parent=1 // pred_check_branch
      %65 = sbr.rel (0) target = $region25
    $region24: #{tpu_custom_call.1} parent=1 // pred_region
      %66 = dma.done [#allocation3], 1024
    $region25: #{tpu_custom_call.1} parent=1 // pred_fallthru
      _
    // Predicated region
    $region26: #{tpu_custom_call.1} parent=1 // pred_check
      _
    $region27: #{tpu_custom_call.1} parent=1 // pred_check_branch
      %68 = sbr.rel (0) target = $region29
    $region28: #{tpu_custom_call.1} parent=1 // pred_region
      %69 = dma.done [#allocation6], 1024
    $region29: #{tpu_custom_call.1} parent=1 // pred_fallthru
      _
    // Predicated region
    $region30: #{tpu_custom_call.1} parent=1 // pred_check
      _
    $region31: #{tpu_custom_call.1} parent=1 // pred_check_branch
      %71 = sbr.rel (0) target = $region33
    $region32: #{tpu_custom_call.1} parent=1 // pred_region
      %72 = dma.done [#allocation6], 1024
    $region33: #{tpu_custom_call.1} parent=1 // pred_fallthru
      _
    // Predicated region
    $region34: #{tpu_custom_call.1} parent=1 // pred_check
      _
    $region35: #{tpu_custom_call.1} parent=1 // pred_check_branch
      %74 = sbr.rel (0) target = $region37
    $region36: #{tpu_custom_call.1} parent=1 // pred_region
      %75 = dma.done [#allocation9], 8192
    $region37: #{tpu_custom_call.1} parent=1 // pred_fallthru
      _
    %v77 = vld [vmem:[#allocation5] sm:$0xf]
    %v78 = vld [vmem:[#allocation5 + $0x4] sm:$0xf]
    %v79 = vld [vmem:[#allocation5 + $0x8] sm:$0xf]
    %v80 = vld [vmem:[#allocation5 + $0xc] sm:$0xf]
    %v81 = vld [vmem:[#allocation5 + $0x10] sm:$0xf]
    %v82 = vld [vmem:[#allocation5 + $0x14] sm:$0xf]
    %v83 = vld [vmem:[#allocation5 + $0x18] sm:$0xf]
    %v84 = vld [vmem:[#allocation5 + $0x1c] sm:$0xf]
    %v85 = vld [vmem:[#allocation5 + $0x20] sm:$0xf]
    %v86 = vld [vmem:[#allocation5 + $0x24] sm:$0xf]
    %v87 = vld [vmem:[#allocation5 + $0x28] sm:$0xf]
    %v88 = vld [vmem:[#allocation5 + $0x2c] sm:$0xf]
    %v89 = vld [vmem:[#allocation5 + $0x30] sm:$0xf]
    %v90 = vld [vmem:[#allocation5 + $0x34] sm:$0xf]
    %v91 = vld [vmem:[#allocation5 + $0x38] sm:$0xf]
    %v92 = vld [vmem:[#allocation5 + $0x3c] sm:$0xf]
    %v93 = vld [vmem:[#allocation7] sm:$0xf]
    %v94 = vld [vmem:[#allocation7 + $0x4] sm:$0xf]
    %v95 = vld [vmem:[#allocation7 + $0x8] sm:$0xf]
    %v96 = vld [vmem:[#allocation7 + $0xc] sm:$0xf]
    %v97 = vld [vmem:[#allocation7 + $0x10] sm:$0xf]
    %v98 = vld [vmem:[#allocation7 + $0x14] sm:$0xf]
    %v99 = vld [vmem:[#allocation7 + $0x18] sm:$0xf]
    %v100 = vld [vmem:[#allocation7 + $0x1c] sm:$0xf]
    %v101 = vld [vmem:[#allocation7 + $0x20] sm:$0xf]
    %v102 = vld [vmem:[#allocation7 + $0x24] sm:$0xf]
    %v103 = vld [vmem:[#allocation7 + $0x28] sm:$0xf]
    %v104 = vld [vmem:[#allocation7 + $0x2c] sm:$0xf]
    %v105 = vld [vmem:[#allocation7 + $0x30] sm:$0xf]
    %v106 = vld [vmem:[#allocation7 + $0x34] sm:$0xf]
    %v107 = vld [vmem:[#allocation7 + $0x38] sm:$0xf]
    %v108 = vld [vmem:[#allocation7 + $0x3c] sm:$0xf]
    %v109 = vld [vmem:[#allocation2] sm:$0xf]
    %v110 = vld [vmem:[#allocation2 + $0x4] sm:$0xf]
    %v111 = vld [vmem:[#allocation2 + $0x8] sm:$0xf]
    %v112 = vld [vmem:[#allocation2 + $0xc] sm:$0xf]
    %v113 = vld [vmem:[#allocation2 + $0x10] sm:$0xf]
    %v114 = vld [vmem:[#allocation2 + $0x14] sm:$0xf]
    %v115 = vld [vmem:[#allocation2 + $0x18] sm:$0xf]
    %v116 = vld [vmem:[#allocation2 + $0x1c] sm:$0xf]
    %v117 = vld [vmem:[#allocation2 + $0x20] sm:$0xf]
    %v118 = vld [vmem:[#allocation2 + $0x24] sm:$0xf]
    %v119 = vld [vmem:[#allocation2 + $0x28] sm:$0xf]
    %v120 = vld [vmem:[#allocation2 + $0x2c] sm:$0xf]
    %v121 = vld [vmem:[#allocation2 + $0x30] sm:$0xf]
    %v122 = vld [vmem:[#allocation2 + $0x34] sm:$0xf]
    %v123 = vld [vmem:[#allocation2 + $0x38] sm:$0xf]
    %v124 = vld [vmem:[#allocation2 + $0x3c] sm:$0xf]
    %v125 = vld [vmem:[#allocation8] sm:$0xf]
    %v126 = vld [vmem:[#allocation8 + $0x4] sm:$0xf]
    %v127 = vld [vmem:[#allocation8 + $0x8] sm:$0xf]
    %v128 = vld [vmem:[#allocation8 + $0xc] sm:$0xf]
    %v129 = vld [vmem:[#allocation8 + $0x10] sm:$0xf]
    %v130 = vld [vmem:[#allocation8 + $0x14] sm:$0xf]
    %v131 = vld [vmem:[#allocation8 + $0x18] sm:$0xf]
    %v132 = vld [vmem:[#allocation8 + $0x1c] sm:$0xf]
    %v133 = vld [vmem:[#allocation8 + $0x20] sm:$0xf]
    %v134 = vld [vmem:[#allocation8 + $0x24] sm:$0xf]
    %v135 = vld [vmem:[#allocation8 + $0x28] sm:$0xf]
    %v136 = vld [vmem:[#allocation8 + $0x2c] sm:$0xf]
    %v137 = vld [vmem:[#allocation8 + $0x30] sm:$0xf]
    %v138 = vld [vmem:[#allocation8 + $0x34] sm:$0xf]
    %v139 = vld [vmem:[#allocation8 + $0x38] sm:$0xf]
    %v140 = vld [vmem:[#allocation8 + $0x3c] sm:$0xf]
    %v141 = vld [vmem:[%s4] sm:$0x1]
    %v158 = vunpack.c.l.b16 %v109
    %v159 = vunpack.c.l.b16 %v110
    %v160 = vunpack.c.l.b16 %v111
    %v161 = vunpack.c.l.b16 %v112
    %v162 = vunpack.c.l.b16 %v113
    %v163 = vunpack.c.l.b16 %v114
    %v164 = vunpack.c.l.b16 %v115
    %v165 = vunpack.c.l.b16 %v116
    %v166 = vunpack.c.l.b16 %v117
    %v167 = vunpack.c.l.b16 %v118
    %v168 = vunpack.c.l.b16 %v119
    %v169 = vunpack.c.l.b16 %v120
    %v170 = vunpack.c.l.b16 %v121
    %v171 = vunpack.c.l.b16 %v122
    %v172 = vunpack.c.l.b16 %v123
    %v173 = vunpack.c.l.b16 %v124
    %v174 = vpack.c.b16 %v159, %v158
    %v175 = vpack.c.b16 %v161, %v160
    %v176 = vpack.c.b16 %v163, %v162
    %v177 = vpack.c.b16 %v165, %v164
    %v178 = vpack.c.b16 %v167, %v166
    %v179 = vpack.c.b16 %v169, %v168
    %v180 = vpack.c.b16 %v171, %v170
    %v181 = vpack.c.b16 %v173, %v172
    %v206 = vunpack.c.l.b16 %v125
    %v207 = vunpack.c.l.b16 %v126
    %v208 = vunpack.c.l.b16 %v127
    %v209 = vunpack.c.l.b16 %v128
    %v210 = vunpack.c.l.b16 %v129
    %v211 = vunpack.c.l.b16 %v130
    %v212 = vunpack.c.l.b16 %v131
    %v213 = vunpack.c.l.b16 %v132
    %v214 = vunpack.c.l.b16 %v133
    %v215 = vunpack.c.l.b16 %v134
    %v216 = vunpack.c.l.b16 %v135
    %v217 = vunpack.c.l.b16 %v136
    %v218 = vunpack.c.l.b16 %v137
    %v219 = vunpack.c.l.b16 %v138
    %v220 = vunpack.c.l.b16 %v139
    %v221 = vunpack.c.l.b16 %v140
    %v222 = vpack.c.b16 %v207, %v206
    %v223 = vpack.c.b16 %v209, %v208
    %v224 = vpack.c.b16 %v211, %v210
    %v225 = vpack.c.b16 %v213, %v212
    %v226 = vpack.c.b16 %v215, %v214
    %v227 = vpack.c.b16 %v217, %v216
    %v228 = vpack.c.b16 %v219, %v218
    %v229 = vpack.c.b16 %v221, %v220
    %238 = vmatprep.subr.bf16.mxu0 0
    %239 = vmatpush1.bf16.msra.mxu0 %v222
    %240 = vmatprep.subr.bf16.mxu0 0
    %241 = vmatpush1.bf16.msra.mxu0 %v223
    %242 = vmatprep.subr.bf16.mxu0 0
    %243 = vmatpush1.bf16.msra.mxu0 %v224
    %244 = vmatprep.subr.bf16.mxu0 0
    %245 = vmatpush1.bf16.msra.mxu0 %v225
    %246 = vmatprep.subr.bf16.mxu0 0
    %247 = vmatpush1.bf16.msra.mxu0 %v226
    %248 = vmatprep.subr.bf16.mxu0 0
    %249 = vmatpush1.bf16.msra.mxu0 %v227
    %250 = vmatprep.subr.bf16.mxu0 0
    %251 = vmatpush1.bf16.msra.mxu0 %v228
    %252 = vmatprep.subr.bf16.mxu0 0
    %253 = vmatpush1.bf16.msra.mxu0 %v229
    %254 = vmatprep.subr.bf16.mxu0 0
    %255 = vmatpush1.bf16.msra.mxu0 0
    %256 = vmatprep.subr.bf16.mxu0 0
    %257 = vmatpush1.bf16.msra.mxu0 0
    %258 = vmatprep.subr.bf16.mxu0 0
    %259 = vmatpush1.bf16.msra.mxu0 0
    %260 = vmatprep.subr.bf16.mxu0 0
    %261 = vmatpush1.bf16.msra.mxu0 0
    %262 = vmatprep.subr.bf16.mxu0 0
    %263 = vmatpush1.bf16.msra.mxu0 0
    %264 = vmatprep.subr.bf16.mxu0 0
    %265 = vmatpush1.bf16.msra.mxu0 0
    %266 = vmatprep.subr.bf16.mxu0 0
    %267 = vmatpush1.bf16.msra.mxu0 0
    %268 = vmatprep.subr.bf16.mxu0 0
    %269 = vmatpush1.bf16.msra.mxu0 0
    %270 = vmatprep.mubr.bf16.mxu0 0
    %271 = vmatmul.mubr.bf16.gmra.mrb[0].mxu0 %v174
    %v272 = vpop.f32.mrb[0].mxu0
    %v273 = vadd.f32 0.0, %v272
    %v274 = vpop.f32.mrb[0].mxu0
    %v275 = vpop.f32.mrb[0].mxu0
    %v276 = vadd.f32 0.0, %v275
    %v277 = vpop.f32.mrb[0].mxu0
    %278 = vmatprep.mubr.bf16.mxu0 0
    %279 = vmatmul.mubr.bf16.gmra.mrb[0].mxu0 %v175
    %v280 = vpop.f32.mrb[0].mxu0
    %v281 = vadd.f32 0.0, %v280
    %v282 = vpop.f32.mrb[0].mxu0
    %v283 = vpop.f32.mrb[0].mxu0
    %v284 = vadd.f32 0.0, %v283
    %v285 = vpop.f32.mrb[0].mxu0
    %286 = vmatprep.mubr.bf16.mxu0 0
    %287 = vmatmul.mubr.bf16.gmra.mrb[0].mxu0 %v176
    %v288 = vpop.f32.mrb[0].mxu0
    %v289 = vadd.f32 0.0, %v288
    %v290 = vpop.f32.mrb[0].mxu0
    %v291 = vpop.f32.mrb[0].mxu0
    %v292 = vadd.f32 0.0, %v291
    %v293 = vpop.f32.mrb[0].mxu0
    %294 = vmatprep.mubr.bf16.mxu0 0
    %295 = vmatmul.mubr.bf16.gmra.mrb[0].mxu0 %v177
    %v296 = vpop.f32.mrb[0].mxu0
    %v297 = vadd.f32 0.0, %v296
    %v298 = vpop.f32.mrb[0].mxu0
    %v299 = vpop.f32.mrb[0].mxu0
    %v300 = vadd.f32 0.0, %v299
    %v301 = vpop.f32.mrb[0].mxu0
    %302 = vmatprep.mubr.bf16.mxu0 0
    %303 = vmatmul.mubr.bf16.gmra.mrb[0].mxu0 %v178
    %v304 = vpop.f32.mrb[0].mxu0
    %v305 = vadd.f32 0.0, %v304
    %v306 = vpop.f32.mrb[0].mxu0
    %v307 = vpop.f32.mrb[0].mxu0
    %v308 = vadd.f32 0.0, %v307
    %v309 = vpop.f32.mrb[0].mxu0
    %310 = vmatprep.mubr.bf16.mxu0 0
    %311 = vmatmul.mubr.bf16.gmra.mrb[0].mxu0 %v179
    %v312 = vpop.f32.mrb[0].mxu0
    %v313 = vadd.f32 0.0, %v312
    %v314 = vpop.f32.mrb[0].mxu0
    %v315 = vpop.f32.mrb[0].mxu0
    %v316 = vadd.f32 0.0, %v315
    %v317 = vpop.f32.mrb[0].mxu0
    %318 = vmatprep.mubr.bf16.mxu0 0
    %319 = vmatmul.mubr.bf16.gmra.mrb[0].mxu0 %v180
    %v320 = vpop.f32.mrb[0].mxu0
    %v321 = vadd.f32 0.0, %v320
    %v322 = vpop.f32.mrb[0].mxu0
    %v323 = vpop.f32.mrb[0].mxu0
    %v324 = vadd.f32 0.0, %v323
    %v325 = vpop.f32.mrb[0].mxu0
    %326 = vmatprep.mubr.bf16.mxu0 0
    %327 = vmatmul.mubr.bf16.gmra.mrb[0].mxu0 %v181
    %v328 = vpop.f32.mrb[0].mxu0
    %v329 = vadd.f32 0.0, %v328
    %v330 = vpop.f32.mrb[0].mxu0
    %v331 = vpop.f32.mrb[0].mxu0
    %v332 = vadd.f32 0.0, %v331
    %v333 = vpop.f32.mrb[0].mxu0
    %334 = vdwg.mxu0
    %s335 = scalar_lea.vmem [#allocation8], 64
    %v336 = vld [vmem:[%s335] sm:$0xf]
    %v337 = vld [vmem:[%s335 + $0x4] sm:$0xf]
    %v338 = vld [vmem:[%s335 + $0x8] sm:$0xf]
    %v339 = vld [vmem:[%s335 + $0xc] sm:$0xf]
    %v340 = vld [vmem:[%s335 + $0x10] sm:$0xf]
    %v341 = vld [vmem:[%s335 + $0x14] sm:$0xf]
    %v342 = vld [vmem:[%s335 + $0x18] sm:$0xf]
    %v343 = vld [vmem:[%s335 + $0x1c] sm:$0xf]
    %v344 = vld [vmem:[%s335 + $0x20] sm:$0xf]
    %v345 = vld [vmem:[%s335 + $0x24] sm:$0xf]
    %v346 = vld [vmem:[%s335 + $0x28] sm:$0xf]
    %v347 = vld [vmem:[%s335 + $0x2c] sm:$0xf]
    %v348 = vld [vmem:[%s335 + $0x30] sm:$0xf]
    %v349 = vld [vmem:[%s335 + $0x34] sm:$0xf]
    %v350 = vld [vmem:[%s335 + $0x38] sm:$0xf]
    %v351 = vld [vmem:[%s335 + $0x3c] sm:$0xf]
    %v352 = vpack.c.bf16 %v276, %v273
    %v353 = vpack.c.bf16 %v284, %v281
    %v354 = vpack.c.bf16 %v292, %v289
    %v355 = vpack.c.bf16 %v300, %v297
    %v356 = vpack.c.bf16 %v308, %v305
    %v357 = vpack.c.bf16 %v316, %v313
    %v358 = vpack.c.bf16 %v324, %v321
    %v359 = vpack.c.bf16 %v332, %v329
    %v376 = vunpack.c.l.b16 %v336
    %v377 = vunpack.c.l.b16 %v337
    %v378 = vunpack.c.l.b16 %v338
    %v379 = vunpack.c.l.b16 %v339
    %v380 = vunpack.c.l.b16 %v340
    %v381 = vunpack.c.l.b16 %v341
    %v382 = vunpack.c.l.b16 %v342
    %v383 = vunpack.c.l.b16 %v343
    %v384 = vunpack.c.l.b16 %v344
    %v385 = vunpack.c.l.b16 %v345
    %v386 = vunpack.c.l.b16 %v346
    %v387 = vunpack.c.l.b16 %v347
    %v388 = vunpack.c.l.b16 %v348
    %v389 = vunpack.c.l.b16 %v349
    %v390 = vunpack.c.l.b16 %v350
    %v391 = vunpack.c.l.b16 %v351
    %v392 = vpack.c.b16 %v377, %v376
    %v393 = vpack.c.b16 %v379, %v378
    %v394 = vpack.c.b16 %v381, %v380
    %v395 = vpack.c.b16 %v383, %v382
    %v396 = vpack.c.b16 %v385, %v384
    %v397 = vpack.c.b16 %v387, %v386
    %v398 = vpack.c.b16 %v389, %v388
    %v399 = vpack.c.b16 %v391, %v390
    %408 = vmatprep.subr.bf16.mxu0 0
    %409 = vmatpush1.bf16.msra.mxu0 %v392
    %410 = vmatprep.subr.bf16.mxu0 0
    %411 = vmatpush1.bf16.msra.mxu0 %v393
    %412 = vmatprep.subr.bf16.mxu0 0
    %413 = vmatpush1.bf16.msra.mxu0 %v394
    %414 = vmatprep.subr.bf16.mxu0 0
    %415 = vmatpush1.bf16.msra.mxu0 %v395
    %416 = vmatprep.subr.bf16.mxu0 0
    %417 = vmatpush1.bf16.msra.mxu0 %v396
    %418 = vmatprep.subr.bf16.mxu0 0
    %419 = vmatpush1.bf16.msra.mxu0 %v397
    %420 = vmatprep.subr.bf16.mxu0 0
    %421 = vmatpush1.bf16.msra.mxu0 %v398
    %422 = vmatprep.subr.bf16.mxu0 0
    %423 = vmatpush1.bf16.msra.mxu0 %v399
    %424 = vmatprep.subr.bf16.mxu0 0
    %425 = vmatpush1.bf16.msra.mxu0 0
    %426 = vmatprep.subr.bf16.mxu0 0
    %427 = vmatpush1.bf16.msra.mxu0 0
    %428 = vmatprep.subr.bf16.mxu0 0
    %429 = vmatpush1.bf16.msra.mxu0 0
    %430 = vmatprep.subr.bf16.mxu0 0
    %431 = vmatpush1.bf16.msra.mxu0 0
    %432 = vmatprep.subr.bf16.mxu0 0
    %433 = vmatpush1.bf16.msra.mxu0 0
    %434 = vmatprep.subr.bf16.mxu0 0
    %435 = vmatpush1.bf16.msra.mxu0 0
    %436 = vmatprep.subr.bf16.mxu0 0
    %437 = vmatpush1.bf16.msra.mxu0 0
    %438 = vmatprep.subr.bf16.mxu0 0
    %439 = vmatpush1.bf16.msra.mxu0 0
    %440 = vmatprep.mubr.bf16.mxu0 0
    %441 = vmatmul.mubr.bf16.gmra.mrb[0].mxu0 %v174
    %v442 = vpop.f32.mrb[0].mxu0
    %v443 = vadd.f32 0.0, %v442
    %v444 = vpop.f32.mrb[0].mxu0
    %v445 = vpop.f32.mrb[0].mxu0
    %v446 = vadd.f32 0.0, %v445
    %v447 = vpop.f32.mrb[0].mxu0
    %448 = vmatprep.mubr.bf16.mxu0 0
    %449 = vmatmul.mubr.bf16.gmra.mrb[0].mxu0 %v175
    %v450 = vpop.f32.mrb[0].mxu0
    %v451 = vadd.f32 0.0, %v450
    %v452 = vpop.f32.mrb[0].mxu0
    %v453 = vpop.f32.mrb[0].mxu0
    %v454 = vadd.f32 0.0, %v453
    %v455 = vpop.f32.mrb[0].mxu0
    %456 = vmatprep.mubr.bf16.mxu0 0
    %457 = vmatmul.mubr.bf16.gmra.mrb[0].mxu0 %v176
    %v458 = vpop.f32.mrb[0].mxu0
    %v459 = vadd.f32 0.0, %v458
    %v460 = vpop.f32.mrb[0].mxu0
    %v461 = vpop.f32.mrb[0].mxu0
    %v462 = vadd.f32 0.0, %v461
    %v463 = vpop.f32.mrb[0].mxu0
    %464 = vmatprep.mubr.bf16.mxu0 0
    %465 = vmatmul.mubr.bf16.gmra.mrb[0].mxu0 %v177
    %v466 = vpop.f32.mrb[0].mxu0
    %v467 = vadd.f32 0.0, %v466
    %v468 = vpop.f32.mrb[0].mxu0
    %v469 = vpop.f32.mrb[0].mxu0
    %v470 = vadd.f32 0.0, %v469
    %v471 = vpop.f32.mrb[0].mxu0
    %472 = vmatprep.mubr.bf16.mxu0 0
    %473 = vmatmul.mubr.bf16.gmra.mrb[0].mxu0 %v178
    %v474 = vpop.f32.mrb[0].mxu0
    %v475 = vadd.f32 0.0, %v474
    %v476 = vpop.f32.mrb[0].mxu0
    %v477 = vpop.f32.mrb[0].mxu0
    %v478 = vadd.f32 0.0, %v477
    %v479 = vpop.f32.mrb[0].mxu0
    %480 = vmatprep.mubr.bf16.mxu0 0
    %481 = vmatmul.mubr.bf16.gmra.mrb[0].mxu0 %v179
    %v482 = vpop.f32.mrb[0].mxu0
    %v483 = vadd.f32 0.0, %v482
    %v484 = vpop.f32.mrb[0].mxu0
    %v485 = vpop.f32.mrb[0].mxu0
    %v486 = vadd.f32 0.0, %v485
    %v487 = vpop.f32.mrb[0].mxu0
    %488 = vmatprep.mubr.bf16.mxu0 0
    %489 = vmatmul.mubr.bf16.gmra.mrb[0].mxu0 %v180
    %v490 = vpop.f32.mrb[0].mxu0
    %v491 = vadd.f32 0.0, %v490
    %v492 = vpop.f32.mrb[0].mxu0
    %v493 = vpop.f32.mrb[0].mxu0
    %v494 = vadd.f32 0.0, %v493
    %v495 = vpop.f32.mrb[0].mxu0
    %496 = vmatprep.mubr.bf16.mxu0 0
    %497 = vmatmul.mubr.bf16.gmra.mrb[0].mxu0 %v181
    %v498 = vpop.f32.mrb[0].mxu0
    %v499 = vadd.f32 0.0, %v498
    %v500 = vpop.f32.mrb[0].mxu0
    %v501 = vpop.f32.mrb[0].mxu0
    %v502 = vadd.f32 0.0, %v501
    %v503 = vpop.f32.mrb[0].mxu0
    %504 = vdwg.mxu0
    %v521 = vunpack.c.l.b16 %v77
    %v522 = vunpack.c.l.b16 %v78
    %v523 = vunpack.c.l.b16 %v79
    %v524 = vunpack.c.l.b16 %v80
    %v525 = vunpack.c.l.b16 %v81
    %v526 = vunpack.c.l.b16 %v82
    %v527 = vunpack.c.l.b16 %v83
    %v528 = vunpack.c.l.b16 %v84
    %v529 = vunpack.c.l.b16 %v85
    %v530 = vunpack.c.l.b16 %v86
    %v531 = vunpack.c.l.b16 %v87
    %v532 = vunpack.c.l.b16 %v88
    %v533 = vunpack.c.l.b16 %v89
    %v534 = vunpack.c.l.b16 %v90
    %v535 = vunpack.c.l.b16 %v91
    %v536 = vunpack.c.l.b16 %v92
    %v537 = vpack.c.b16 %v522, %v521
    %v538 = vpack.c.b16 %v524, %v523
    %v539 = vpack.c.b16 %v526, %v525
    %v540 = vpack.c.b16 %v528, %v527
    %v541 = vpack.c.b16 %v530, %v529
    %v542 = vpack.c.b16 %v532, %v531
    %v543 = vpack.c.b16 %v534, %v533
    %v544 = vpack.c.b16 %v536, %v535
    %553 = vmatprep.subr.bf16.mxu0 0
    %554 = vmatpush1.bf16.msra.mxu0 %v352
    %555 = vmatprep.subr.bf16.mxu0 0
    %556 = vmatpush1.bf16.msra.mxu0 %v353
    %557 = vmatprep.subr.bf16.mxu0 0
    %558 = vmatpush1.bf16.msra.mxu0 %v354
    %559 = vmatprep.subr.bf16.mxu0 0
    %560 = vmatpush1.bf16.msra.mxu0 %v355
    %561 = vmatprep.subr.bf16.mxu0 0
    %562 = vmatpush1.bf16.msra.mxu0 %v356
    %563 = vmatprep.subr.bf16.mxu0 0
    %564 = vmatpush1.bf16.msra.mxu0 %v357
    %565 = vmatprep.subr.bf16.mxu0 0
    %566 = vmatpush1.bf16.msra.mxu0 %v358
    %567 = vmatprep.subr.bf16.mxu0 0
    %568 = vmatpush1.bf16.msra.mxu0 %v359
    %569 = vmatprep.subr.bf16.mxu0 0
    %570 = vmatpush1.bf16.msra.mxu0 0
    %571 = vmatprep.subr.bf16.mxu0 0
    %572 = vmatpush1.bf16.msra.mxu0 0
    %573 = vmatprep.subr.bf16.mxu0 0
    %574 = vmatpush1.bf16.msra.mxu0 0
    %575 = vmatprep.subr.bf16.mxu0 0
    %576 = vmatpush1.bf16.msra.mxu0 0
    %577 = vmatprep.subr.bf16.mxu0 0
    %578 = vmatpush1.bf16.msra.mxu0 0
    %579 = vmatprep.subr.bf16.mxu0 0
    %580 = vmatpush1.bf16.msra.mxu0 0
    %581 = vmatprep.subr.bf16.mxu0 0
    %582 = vmatpush1.bf16.msra.mxu0 0
    %583 = vmatprep.subr.bf16.mxu0 0
    %584 = vmatpush1.bf16.msra.mxu0 0
    %585 = vmatprep.mubr.bf16.mxu0 0
    %586 = vmatmul.mubr.bf16.gmra.mrb[0].mxu0 %v537
    %v587 = vpop.f32.mrb[0].mxu0
    %v588 = vadd.f32 %v443, %v587
    %v589 = vpop.f32.mrb[0].mxu0
    %v590 = vpop.f32.mrb[0].mxu0
    %v591 = vadd.f32 %v446, %v590
    %v592 = vpop.f32.mrb[0].mxu0
    %593 = vmatprep.mubr.bf16.mxu0 0
    %594 = vmatmul.mubr.bf16.gmra.mrb[0].mxu0 %v538
    %v595 = vpop.f32.mrb[0].mxu0
    %v596 = vadd.f32 %v451, %v595
    %v597 = vpop.f32.mrb[0].mxu0
    %v598 = vpop.f32.mrb[0].mxu0
    %v599 = vadd.f32 %v454, %v598
    %v600 = vpop.f32.mrb[0].mxu0
    %601 = vmatprep.mubr.bf16.mxu0 0
    %602 = vmatmul.mubr.bf16.gmra.mrb[0].mxu0 %v539
    %v603 = vpop.f32.mrb[0].mxu0
    %v604 = vadd.f32 %v459, %v603
    %v605 = vpop.f32.mrb[0].mxu0
    %v606 = vpop.f32.mrb[0].mxu0
    %v607 = vadd.f32 %v462, %v606
    %v608 = vpop.f32.mrb[0].mxu0
    %609 = vmatprep.mubr.bf16.mxu0 0
    %610 = vmatmul.mubr.bf16.gmra.mrb[0].mxu0 %v540
    %v611 = vpop.f32.mrb[0].mxu0
    %v612 = vadd.f32 %v467, %v611
    %v613 = vpop.f32.mrb[0].mxu0
    %v614 = vpop.f32.mrb[0].mxu0
    %v615 = vadd.f32 %v470, %v614
    %v616 = vpop.f32.mrb[0].mxu0
    %617 = vmatprep.mubr.bf16.mxu0 0
    %618 = vmatmul.mubr.bf16.gmra.mrb[0].mxu0 %v541
    %v619 = vpop.f32.mrb[0].mxu0
    %v620 = vadd.f32 %v475, %v619
    %v621 = vpop.f32.mrb[0].mxu0
    %v622 = vpop.f32.mrb[0].mxu0
    %v623 = vadd.f32 %v478, %v622
    %v624 = vpop.f32.mrb[0].mxu0
    %625 = vmatprep.mubr.bf16.mxu0 0
    %626 = vmatmul.mubr.bf16.gmra.mrb[0].mxu0 %v542
    %v627 = vpop.f32.mrb[0].mxu0
    %v628 = vadd.f32 %v483, %v627
    %v629 = vpop.f32.mrb[0].mxu0
    %v630 = vpop.f32.mrb[0].mxu0
    %v631 = vadd.f32 %v486, %v630
    %v632 = vpop.f32.mrb[0].mxu0
    %633 = vmatprep.mubr.bf16.mxu0 0
    %634 = vmatmul.mubr.bf16.gmra.mrb[0].mxu0 %v543
    %v635 = vpop.f32.mrb[0].mxu0
    %v636 = vadd.f32 %v491, %v635
    %v637 = vpop.f32.mrb[0].mxu0
    %v638 = vpop.f32.mrb[0].mxu0
    %v639 = vadd.f32 %v494, %v638
    %v640 = vpop.f32.mrb[0].mxu0
    %641 = vmatprep.mubr.bf16.mxu0 0
    %642 = vmatmul.mubr.bf16.gmra.mrb[0].mxu0 %v544
    %v643 = vpop.f32.mrb[0].mxu0
    %v644 = vadd.f32 %v499, %v643
    %v645 = vpop.f32.mrb[0].mxu0
    %v646 = vpop.f32.mrb[0].mxu0
    %v647 = vadd.f32 %v502, %v646
    %v648 = vpop.f32.mrb[0].mxu0
    %649 = vdwg.mxu0
    %v650 = vlaneseq
    %v651 = vshrl.u32 %v650, 7
    %v652 = vsub.s32 0, %v651
    %v653 = vrot.slane %v141, %v652
    %v654 = vadd.f32 %v588, %v653
    %v655 = vadd.f32 %v591, %v653
    %v656 = vadd.f32 %v596, %v653
    %v657 = vadd.f32 %v599, %v653
    %v658 = vadd.f32 %v604, %v653
    %v659 = vadd.f32 %v607, %v653
    %v660 = vadd.f32 %v612, %v653
    %v661 = vadd.f32 %v615, %v653
    %v662 = vadd.f32 %v620, %v653
    %v663 = vadd.f32 %v623, %v653
    %v664 = vadd.f32 %v628, %v653
    %v665 = vadd.f32 %v631, %v653
    %v666 = vadd.f32 %v636, %v653
    %v667 = vadd.f32 %v639, %v653
    %v668 = vadd.f32 %v644, %v653
    %v669 = vadd.f32 %v647, %v653
    %v670 = vmax.f32 %v654, 0.0
    %v671 = vmax.f32 %v655, 0.0
    %v672 = vmax.f32 %v656, 0.0
    %v673 = vmax.f32 %v657, 0.0
    %v674 = vmax.f32 %v658, 0.0
    %v675 = vmax.f32 %v659, 0.0
    %v676 = vmax.f32 %v660, 0.0
    %v677 = vmax.f32 %v661, 0.0
    %v678 = vmax.f32 %v662, 0.0
    %v679 = vmax.f32 %v663, 0.0
    %v680 = vmax.f32 %v664, 0.0
    %v681 = vmax.f32 %v665, 0.0
    %v682 = vmax.f32 %v666, 0.0
    %v683 = vmax.f32 %v667, 0.0
    %v684 = vmax.f32 %v668, 0.0
    %v685 = vmax.f32 %v669, 0.0
    %v686 = vpack.c.bf16 %v671, %v670
    %v687 = vpack.c.bf16 %v673, %v672
    %v688 = vpack.c.bf16 %v675, %v674
    %v689 = vpack.c.bf16 %v677, %v676
    %v690 = vpack.c.bf16 %v679, %v678
    %v691 = vpack.c.bf16 %v681, %v680
    %v692 = vpack.c.bf16 %v683, %v682
    %v693 = vpack.c.bf16 %v685, %v684
    %s694 = scalar_lea.vmem [#allocation8], 128
    %v695 = vld [vmem:[%s694] sm:$0xf]
    %v696 = vld [vmem:[%s694 + $0x4] sm:$0xf]
    %v697 = vld [vmem:[%s694 + $0x8] sm:$0xf]
    %v698 = vld [vmem:[%s694 + $0xc] sm:$0xf]
    %v699 = vld [vmem:[%s694 + $0x10] sm:$0xf]
    %v700 = vld [vmem:[%s694 + $0x14] sm:$0xf]
    %v701 = vld [vmem:[%s694 + $0x18] sm:$0xf]
    %v702 = vld [vmem:[%s694 + $0x1c] sm:$0xf]
    %v703 = vld [vmem:[%s694 + $0x20] sm:$0xf]
    %v704 = vld [vmem:[%s694 + $0x24] sm:$0xf]
    %v705 = vld [vmem:[%s694 + $0x28] sm:$0xf]
    %v706 = vld [vmem:[%s694 + $0x2c] sm:$0xf]
    %v707 = vld [vmem:[%s694 + $0x30] sm:$0xf]
    %v708 = vld [vmem:[%s694 + $0x34] sm:$0xf]
    %v709 = vld [vmem:[%s694 + $0x38] sm:$0xf]
    %v710 = vld [vmem:[%s694 + $0x3c] sm:$0xf]
    %v711 = vld [vmem:[%s4 + $0x1] sm:$0x1]
    %v728 = vunpack.c.l.b16 %v695
    %v729 = vunpack.c.l.b16 %v696
    %v730 = vunpack.c.l.b16 %v697
    %v731 = vunpack.c.l.b16 %v698
    %v732 = vunpack.c.l.b16 %v699
    %v733 = vunpack.c.l.b16 %v700
    %v734 = vunpack.c.l.b16 %v701
    %v735 = vunpack.c.l.b16 %v702
    %v736 = vunpack.c.l.b16 %v703
    %v737 = vunpack.c.l.b16 %v704
    %v738 = vunpack.c.l.b16 %v705
    %v739 = vunpack.c.l.b16 %v706
    %v740 = vunpack.c.l.b16 %v707
    %v741 = vunpack.c.l.b16 %v708
    %v742 = vunpack.c.l.b16 %v709
    %v743 = vunpack.c.l.b16 %v710
    %v744 = vpack.c.b16 %v729, %v728
    %v745 = vpack.c.b16 %v731, %v730
    %v746 = vpack.c.b16 %v733, %v732
    %v747 = vpack.c.b16 %v735, %v734
    %v748 = vpack.c.b16 %v737, %v736
    %v749 = vpack.c.b16 %v739, %v738
    %v750 = vpack.c.b16 %v741, %v740
    %v751 = vpack.c.b16 %v743, %v742
    %760 = vmatprep.subr.bf16.mxu0 0
    %761 = vmatpush1.bf16.msra.mxu0 %v744
    %762 = vmatprep.subr.bf16.mxu0 0
    %763 = vmatpush1.bf16.msra.mxu0 %v745
    %764 = vmatprep.subr.bf16.mxu0 0
    %765 = vmatpush1.bf16.msra.mxu0 %v746
    %766 = vmatprep.subr.bf16.mxu0 0
    %767 = vmatpush1.bf16.msra.mxu0 %v747
    %768 = vmatprep.subr.bf16.mxu0 0
    %769 = vmatpush1.bf16.msra.mxu0 %v748
    %770 = vmatprep.subr.bf16.mxu0 0
    %771 = vmatpush1.bf16.msra.mxu0 %v749
    %772 = vmatprep.subr.bf16.mxu0 0
    %773 = vmatpush1.bf16.msra.mxu0 %v750
    %774 = vmatprep.subr.bf16.mxu0 0
    %775 = vmatpush1.bf16.msra.mxu0 %v751
    %776 = vmatprep.subr.bf16.mxu0 0
    %777 = vmatpush1.bf16.msra.mxu0 0
    %778 = vmatprep.subr.bf16.mxu0 0
    %779 = vmatpush1.bf16.msra.mxu0 0
    %780 = vmatprep.subr.bf16.mxu0 0
    %781 = vmatpush1.bf16.msra.mxu0 0
    %782 = vmatprep.subr.bf16.mxu0 0
    %783 = vmatpush1.bf16.msra.mxu0 0
    %784 = vmatprep.subr.bf16.mxu0 0
    %785 = vmatpush1.bf16.msra.mxu0 0
    %786 = vmatprep.subr.bf16.mxu0 0
    %787 = vmatpush1.bf16.msra.mxu0 0
    %788 = vmatprep.subr.bf16.mxu0 0
    %789 = vmatpush1.bf16.msra.mxu0 0
    %790 = vmatprep.subr.bf16.mxu0 0
    %791 = vmatpush1.bf16.msra.mxu0 0
    %792 = vmatprep.mubr.bf16.mxu0 0
    %793 = vmatmul.mubr.bf16.gmra.mrb[0].mxu0 %v686
    %v794 = vpop.f32.mrb[0].mxu0
    %v795 = vadd.f32 0.0, %v794
    %v796 = vpop.f32.mrb[0].mxu0
    %v797 = vpop.f32.mrb[0].mxu0
    %v798 = vadd.f32 0.0, %v797
    %v799 = vpop.f32.mrb[0].mxu0
    %800 = vmatprep.mubr.bf16.mxu0 0
    %801 = vmatmul.mubr.bf16.gmra.mrb[0].mxu0 %v687
    %v802 = vpop.f32.mrb[0].mxu0
    %v803 = vadd.f32 0.0, %v802
    %v804 = vpop.f32.mrb[0].mxu0
    %v805 = vpop.f32.mrb[0].mxu0
    %v806 = vadd.f32 0.0, %v805
    %v807 = vpop.f32.mrb[0].mxu0
    %808 = vmatprep.mubr.bf16.mxu0 0
    %809 = vmatmul.mubr.bf16.gmra.mrb[0].mxu0 %v688
    %v810 = vpop.f32.mrb[0].mxu0
    %v811 = vadd.f32 0.0, %v810
    %v812 = vpop.f32.mrb[0].mxu0
    %v813 = vpop.f32.mrb[0].mxu0
    %v814 = vadd.f32 0.0, %v813
    %v815 = vpop.f32.mrb[0].mxu0
    %816 = vmatprep.mubr.bf16.mxu0 0
    %817 = vmatmul.mubr.bf16.gmra.mrb[0].mxu0 %v689
    %v818 = vpop.f32.mrb[0].mxu0
    %v819 = vadd.f32 0.0, %v818
    %v820 = vpop.f32.mrb[0].mxu0
    %v821 = vpop.f32.mrb[0].mxu0
    %v822 = vadd.f32 0.0, %v821
    %v823 = vpop.f32.mrb[0].mxu0
    %824 = vmatprep.mubr.bf16.mxu0 0
    %825 = vmatmul.mubr.bf16.gmra.mrb[0].mxu0 %v690
    %v826 = vpop.f32.mrb[0].mxu0
    %v827 = vadd.f32 0.0, %v826
    %v828 = vpop.f32.mrb[0].mxu0
    %v829 = vpop.f32.mrb[0].mxu0
    %v830 = vadd.f32 0.0, %v829
    %v831 = vpop.f32.mrb[0].mxu0
    %832 = vmatprep.mubr.bf16.mxu0 0
    %833 = vmatmul.mubr.bf16.gmra.mrb[0].mxu0 %v691
    %v834 = vpop.f32.mrb[0].mxu0
    %v835 = vadd.f32 0.0, %v834
    %v836 = vpop.f32.mrb[0].mxu0
    %v837 = vpop.f32.mrb[0].mxu0
    %v838 = vadd.f32 0.0, %v837
    %v839 = vpop.f32.mrb[0].mxu0
    %840 = vmatprep.mubr.bf16.mxu0 0
    %841 = vmatmul.mubr.bf16.gmra.mrb[0].mxu0 %v692
    %v842 = vpop.f32.mrb[0].mxu0
    %v843 = vadd.f32 0.0, %v842
    %v844 = vpop.f32.mrb[0].mxu0
    %v845 = vpop.f32.mrb[0].mxu0
    %v846 = vadd.f32 0.0, %v845
    %v847 = vpop.f32.mrb[0].mxu0
    %848 = vmatprep.mubr.bf16.mxu0 0
    %849 = vmatmul.mubr.bf16.gmra.mrb[0].mxu0 %v693
    %v850 = vpop.f32.mrb[0].mxu0
    %v851 = vadd.f32 0.0, %v850
    %v852 = vpop.f32.mrb[0].mxu0
    %v853 = vpop.f32.mrb[0].mxu0
    %v854 = vadd.f32 0.0, %v853
    %v855 = vpop.f32.mrb[0].mxu0
    %856 = vdwg.mxu0
    %v857 = vpack.c.bf16 %v798, %v795
    %v858 = vpack.c.bf16 %v806, %v803
    %v859 = vpack.c.bf16 %v814, %v811
    %v860 = vpack.c.bf16 %v822, %v819
    %v861 = vpack.c.bf16 %v830, %v827
    %v862 = vpack.c.bf16 %v838, %v835
    %v863 = vpack.c.bf16 %v846, %v843
    %v864 = vpack.c.bf16 %v854, %v851
    %v865 = vlaneseq
    %v866 = vshrl.u32 %v865, 7
    %v867 = vsub.s32 0, %v866
    %v868 = vrot.slane %v711, %v867
    %v885 = vunpack.c.l.b16 %v93
    %v886 = vunpack.c.l.b16 %v94
    %v887 = vunpack.c.l.b16 %v95
    %v888 = vunpack.c.l.b16 %v96
    %v889 = vunpack.c.l.b16 %v97
    %v890 = vunpack.c.l.b16 %v98
    %v891 = vunpack.c.l.b16 %v99
    %v892 = vunpack.c.l.b16 %v100
    %v893 = vunpack.c.l.b16 %v101
    %v894 = vunpack.c.l.b16 %v102
    %v895 = vunpack.c.l.b16 %v103
    %v896 = vunpack.c.l.b16 %v104
    %v897 = vunpack.c.l.b16 %v105
    %v898 = vunpack.c.l.b16 %v106
    %v899 = vunpack.c.l.b16 %v107
    %v900 = vunpack.c.l.b16 %v108
    %v901 = vpack.c.b16 %v886, %v885
    %v902 = vpack.c.b16 %v888, %v887
    %v903 = vpack.c.b16 %v890, %v889
    %v904 = vpack.c.b16 %v892, %v891
    %v905 = vpack.c.b16 %v894, %v893
    %v906 = vpack.c.b16 %v896, %v895
    %v907 = vpack.c.b16 %v898, %v897
    %v908 = vpack.c.b16 %v900, %v899
    %917 = vmatprep.subr.bf16.mxu0 0
    %918 = vmatpush1.bf16.msra.mxu0 %v857
    %919 = vmatprep.subr.bf16.mxu0 0
    %920 = vmatpush1.bf16.msra.mxu0 %v858
    %921 = vmatprep.subr.bf16.mxu0 0
    %922 = vmatpush1.bf16.msra.mxu0 %v859
    %923 = vmatprep.subr.bf16.mxu0 0
    %924 = vmatpush1.bf16.msra.mxu0 %v860
    %925 = vmatprep.subr.bf16.mxu0 0
    %926 = vmatpush1.bf16.msra.mxu0 %v861
    %927 = vmatprep.subr.bf16.mxu0 0
    %928 = vmatpush1.bf16.msra.mxu0 %v862
    %929 = vmatprep.subr.bf16.mxu0 0
    %930 = vmatpush1.bf16.msra.mxu0 %v863
    %931 = vmatprep.subr.bf16.mxu0 0
    %932 = vmatpush1.bf16.msra.mxu0 %v864
    %933 = vmatprep.subr.bf16.mxu0 0
    %934 = vmatpush1.bf16.msra.mxu0 0
    %935 = vmatprep.subr.bf16.mxu0 0
    %936 = vmatpush1.bf16.msra.mxu0 0
    %937 = vmatprep.subr.bf16.mxu0 0
    %938 = vmatpush1.bf16.msra.mxu0 0
    %939 = vmatprep.subr.bf16.mxu0 0
    %940 = vmatpush1.bf16.msra.mxu0 0
    %941 = vmatprep.subr.bf16.mxu0 0
    %942 = vmatpush1.bf16.msra.mxu0 0
    %943 = vmatprep.subr.bf16.mxu0 0
    %944 = vmatpush1.bf16.msra.mxu0 0
    %945 = vmatprep.subr.bf16.mxu0 0
    %946 = vmatpush1.bf16.msra.mxu0 0
    %947 = vmatprep.subr.bf16.mxu0 0
    %948 = vmatpush1.bf16.msra.mxu0 0
    %949 = vmatprep.mubr.bf16.mxu0 0
    %950 = vmatmul.mubr.bf16.gmra.mrb[0].mxu0 %v901
    %v951 = vpop.f32.mrb[0].mxu0
    %v952 = vadd.f32 %v868, %v951
    %v953 = vpop.f32.mrb[0].mxu0
    %v954 = vpop.f32.mrb[0].mxu0
    %v955 = vadd.f32 %v868, %v954
    %v956 = vpop.f32.mrb[0].mxu0
    %957 = vmatprep.mubr.bf16.mxu0 0
    %958 = vmatmul.mubr.bf16.gmra.mrb[0].mxu0 %v902
    %v959 = vpop.f32.mrb[0].mxu0
    %v960 = vadd.f32 %v868, %v959
    %v961 = vpop.f32.mrb[0].mxu0
    %v962 = vpop.f32.mrb[0].mxu0
    %v963 = vadd.f32 %v868, %v962
    %v964 = vpop.f32.mrb[0].mxu0
    %965 = vmatprep.mubr.bf16.mxu0 0
    %966 = vmatmul.mubr.bf16.gmra.mrb[0].mxu0 %v903
    %v967 = vpop.f32.mrb[0].mxu0
    %v968 = vadd.f32 %v868, %v967
    %v969 = vpop.f32.mrb[0].mxu0
    %v970 = vpop.f32.mrb[0].mxu0
    %v971 = vadd.f32 %v868, %v970
    %v972 = vpop.f32.mrb[0].mxu0
    %973 = vmatprep.mubr.bf16.mxu0 0
    %974 = vmatmul.mubr.bf16.gmra.mrb[0].mxu0 %v904
    %v975 = vpop.f32.mrb[0].mxu0
    %v976 = vadd.f32 %v868, %v975
    %v977 = vpop.f32.mrb[0].mxu0
    %v978 = vpop.f32.mrb[0].mxu0
    %v979 = vadd.f32 %v868, %v978
    %v980 = vpop.f32.mrb[0].mxu0
    %981 = vmatprep.mubr.bf16.mxu0 0
    %982 = vmatmul.mubr.bf16.gmra.mrb[0].mxu0 %v905
    %v983 = vpop.f32.mrb[0].mxu0
    %v984 = vadd.f32 %v868, %v983
    %v985 = vpop.f32.mrb[0].mxu0
    %v986 = vpop.f32.mrb[0].mxu0
    %v987 = vadd.f32 %v868, %v986
    %v988 = vpop.f32.mrb[0].mxu0
    %989 = vmatprep.mubr.bf16.mxu0 0
    %990 = vmatmul.mubr.bf16.gmra.mrb[0].mxu0 %v906
    %v991 = vpop.f32.mrb[0].mxu0
    %v992 = vadd.f32 %v868, %v991
    %v993 = vpop.f32.mrb[0].mxu0
    %v994 = vpop.f32.mrb[0].mxu0
    %v995 = vadd.f32 %v868, %v994
    %v996 = vpop.f32.mrb[0].mxu0
    %997 = vmatprep.mubr.bf16.mxu0 0
    %998 = vmatmul.mubr.bf16.gmra.mrb[0].mxu0 %v907
    %v999 = vpop.f32.mrb[0].mxu0
    %v1000 = vadd.f32 %v868, %v999
    %v1001 = vpop.f32.mrb[0].mxu0
    %v1002 = vpop.f32.mrb[0].mxu0
    %v1003 = vadd.f32 %v868, %v1002
    %v1004 = vpop.f32.mrb[0].mxu0
    %1005 = vmatprep.mubr.bf16.mxu0 0
    %1006 = vmatmul.mubr.bf16.gmra.mrb[0].mxu0 %v908
    %v1007 = vpop.f32.mrb[0].mxu0
    %v1008 = vadd.f32 %v868, %v1007
    %v1009 = vpop.f32.mrb[0].mxu0
    %v1010 = vpop.f32.mrb[0].mxu0
    %v1011 = vadd.f32 %v868, %v1010
    %v1012 = vpop.f32.mrb[0].mxu0
    %1013 = vdwg.mxu0
    %v1014 = vmax.f32 %v952, 0.0
    %v1015 = vmax.f32 %v955, 0.0
    %v1016 = vmax.f32 %v960, 0.0
    %v1017 = vmax.f32 %v963, 0.0
    %v1018 = vmax.f32 %v968, 0.0
    %v1019 = vmax.f32 %v971, 0.0
    %v1020 = vmax.f32 %v976, 0.0
    %v1021 = vmax.f32 %v979, 0.0
    %v1022 = vmax.f32 %v984, 0.0
    %v1023 = vmax.f32 %v987, 0.0
    %v1024 = vmax.f32 %v992, 0.0
    %v1025 = vmax.f32 %v995, 0.0
    %v1026 = vmax.f32 %v1000, 0.0
    %v1027 = vmax.f32 %v1003, 0.0
    %v1028 = vmax.f32 %v1008, 0.0
    %v1029 = vmax.f32 %v1011, 0.0
    %v1030 = vpack.c.bf16 %v1015, %v1014
    %v1031 = vpack.c.bf16 %v1017, %v1016
    %v1032 = vpack.c.bf16 %v1019, %v1018
    %v1033 = vpack.c.bf16 %v1021, %v1020
    %v1034 = vpack.c.bf16 %v1023, %v1022
    %v1035 = vpack.c.bf16 %v1025, %v1024
    %v1036 = vpack.c.bf16 %v1027, %v1026
    %v1037 = vpack.c.bf16 %v1029, %v1028
    %s1038 = scalar_lea.vmem [#allocation8], 256
    %v1039 = vld [vmem:[%s1038] sm:$0xf]
    %v1040 = vld [vmem:[%s1038 + $0x4] sm:$0xf]
    %v1041 = vld [vmem:[%s1038 + $0x8] sm:$0xf]
    %v1042 = vld [vmem:[%s1038 + $0xc] sm:$0xf]
    %v1043 = vld [vmem:[%s1038 + $0x10] sm:$0xf]
    %v1044 = vld [vmem:[%s1038 + $0x14] sm:$0xf]
    %v1045 = vld [vmem:[%s1038 + $0x18] sm:$0xf]
    %v1046 = vld [vmem:[%s1038 + $0x1c] sm:$0xf]
    %v1047 = vld [vmem:[%s1038 + $0x20] sm:$0xf]
    %v1048 = vld [vmem:[%s1038 + $0x24] sm:$0xf]
    %v1049 = vld [vmem:[%s1038 + $0x28] sm:$0xf]
    %v1050 = vld [vmem:[%s1038 + $0x2c] sm:$0xf]
    %v1051 = vld [vmem:[%s1038 + $0x30] sm:$0xf]
    %v1052 = vld [vmem:[%s1038 + $0x34] sm:$0xf]
    %v1053 = vld [vmem:[%s1038 + $0x38] sm:$0xf]
    %v1054 = vld [vmem:[%s1038 + $0x3c] sm:$0xf]
    %v1055 = vld [vmem:[%s4 + $0x2] sm:$0x1]
    %v1072 = vunpack.c.l.b16 %v1039
    %v1073 = vunpack.c.l.b16 %v1040
    %v1074 = vunpack.c.l.b16 %v1041
    %v1075 = vunpack.c.l.b16 %v1042
    %v1076 = vunpack.c.l.b16 %v1043
    %v1077 = vunpack.c.l.b16 %v1044
    %v1078 = vunpack.c.l.b16 %v1045
    %v1079 = vunpack.c.l.b16 %v1046
    %v1080 = vunpack.c.l.b16 %v1047
    %v1081 = vunpack.c.l.b16 %v1048
    %v1082 = vunpack.c.l.b16 %v1049
    %v1083 = vunpack.c.l.b16 %v1050
    %v1084 = vunpack.c.l.b16 %v1051
    %v1085 = vunpack.c.l.b16 %v1052
    %v1086 = vunpack.c.l.b16 %v1053
    %v1087 = vunpack.c.l.b16 %v1054
    %v1088 = vpack.c.b16 %v1073, %v1072
    %v1089 = vpack.c.b16 %v1075, %v1074
    %v1090 = vpack.c.b16 %v1077, %v1076
    %v1091 = vpack.c.b16 %v1079, %v1078
    %v1092 = vpack.c.b16 %v1081, %v1080
    %v1093 = vpack.c.b16 %v1083, %v1082
    %v1094 = vpack.c.b16 %v1085, %v1084
    %v1095 = vpack.c.b16 %v1087, %v1086
    %1104 = vmatprep.subr.bf16.mxu0 0
    %1105 = vmatpush1.bf16.msra.mxu0 %v1088
    %1106 = vmatprep.subr.bf16.mxu0 0
    %1107 = vmatpush1.bf16.msra.mxu0 %v1089
    %1108 = vmatprep.subr.bf16.mxu0 0
    %1109 = vmatpush1.bf16.msra.mxu0 %v1090
    %1110 = vmatprep.subr.bf16.mxu0 0
    %1111 = vmatpush1.bf16.msra.mxu0 %v1091
    %1112 = vmatprep.subr.bf16.mxu0 0
    %1113 = vmatpush1.bf16.msra.mxu0 %v1092
    %1114 = vmatprep.subr.bf16.mxu0 0
    %1115 = vmatpush1.bf16.msra.mxu0 %v1093
    %1116 = vmatprep.subr.bf16.mxu0 0
    %1117 = vmatpush1.bf16.msra.mxu0 %v1094
    %1118 = vmatprep.subr.bf16.mxu0 0
    %1119 = vmatpush1.bf16.msra.mxu0 %v1095
    %1120 = vmatprep.subr.bf16.mxu0 0
    %1121 = vmatpush1.bf16.msra.mxu0 0
    %1122 = vmatprep.subr.bf16.mxu0 0
    %1123 = vmatpush1.bf16.msra.mxu0 0
    %1124 = vmatprep.subr.bf16.mxu0 0
    %1125 = vmatpush1.bf16.msra.mxu0 0
    %1126 = vmatprep.subr.bf16.mxu0 0
    %1127 = vmatpush1.bf16.msra.mxu0 0
    %1128 = vmatprep.subr.bf16.mxu0 0
    %1129 = vmatpush1.bf16.msra.mxu0 0
    %1130 = vmatprep.subr.bf16.mxu0 0
    %1131 = vmatpush1.bf16.msra.mxu0 0
    %1132 = vmatprep.subr.bf16.mxu0 0
    %1133 = vmatpush1.bf16.msra.mxu0 0
    %1134 = vmatprep.subr.bf16.mxu0 0
    %1135 = vmatpush1.bf16.msra.mxu0 0
    %1136 = vmatprep.mubr.bf16.mxu0 0
    %1137 = vmatmul.mubr.bf16.gmra.mrb[0].mxu0 %v1030
    %v1138 = vpop.f32.mrb[0].mxu0
    %v1139 = vadd.f32 0.0, %v1138
    %v1140 = vpop.f32.mrb[0].mxu0
    %v1141 = vpop.f32.mrb[0].mxu0
    %v1142 = vadd.f32 0.0, %v1141
    %v1143 = vpop.f32.mrb[0].mxu0
    %1144 = vmatprep.mubr.bf16.mxu0 0
    %1145 = vmatmul.mubr.bf16.gmra.mrb[0].mxu0 %v1031
    %v1146 = vpop.f32.mrb[0].mxu0
    %v1147 = vadd.f32 0.0, %v1146
    %v1148 = vpop.f32.mrb[0].mxu0
    %v1149 = vpop.f32.mrb[0].mxu0
    %v1150 = vadd.f32 0.0, %v1149
    %v1151 = vpop.f32.mrb[0].mxu0
    %1152 = vmatprep.mubr.bf16.mxu0 0
    %1153 = vmatmul.mubr.bf16.gmra.mrb[0].mxu0 %v1032
    %v1154 = vpop.f32.mrb[0].mxu0
    %v1155 = vadd.f32 0.0, %v1154
    %v1156 = vpop.f32.mrb[0].mxu0
    %v1157 = vpop.f32.mrb[0].mxu0
    %v1158 = vadd.f32 0.0, %v1157
    %v1159 = vpop.f32.mrb[0].mxu0
    %1160 = vmatprep.mubr.bf16.mxu0 0
    %1161 = vmatmul.mubr.bf16.gmra.mrb[0].mxu0 %v1033
    %v1162 = vpop.f32.mrb[0].mxu0
    %v1163 = vadd.f32 0.0, %v1162
    %v1164 = vpop.f32.mrb[0].mxu0
    %v1165 = vpop.f32.mrb[0].mxu0
    %v1166 = vadd.f32 0.0, %v1165
    %v1167 = vpop.f32.mrb[0].mxu0
    %1168 = vmatprep.mubr.bf16.mxu0 0
    %1169 = vmatmul.mubr.bf16.gmra.mrb[0].mxu0 %v1034
    %v1170 = vpop.f32.mrb[0].mxu0
    %v1171 = vadd.f32 0.0, %v1170
    %v1172 = vpop.f32.mrb[0].mxu0
    %v1173 = vpop.f32.mrb[0].mxu0
    %v1174 = vadd.f32 0.0, %v1173
    %v1175 = vpop.f32.mrb[0].mxu0
    %1176 = vmatprep.mubr.bf16.mxu0 0
    %1177 = vmatmul.mubr.bf16.gmra.mrb[0].mxu0 %v1035
    %v1178 = vpop.f32.mrb[0].mxu0
    %v1179 = vadd.f32 0.0, %v1178
    %v1180 = vpop.f32.mrb[0].mxu0
    %v1181 = vpop.f32.mrb[0].mxu0
    %v1182 = vadd.f32 0.0, %v1181
    %v1183 = vpop.f32.mrb[0].mxu0
    %1184 = vmatprep.mubr.bf16.mxu0 0
    %1185 = vmatmul.mubr.bf16.gmra.mrb[0].mxu0 %v1036
    %v1186 = vpop.f32.mrb[0].mxu0
    %v1187 = vadd.f32 0.0, %v1186
    %v1188 = vpop.f32.mrb[0].mxu0
    %v1189 = vpop.f32.mrb[0].mxu0
    %v1190 = vadd.f32 0.0, %v1189
    %v1191 = vpop.f32.mrb[0].mxu0
    %1192 = vmatprep.mubr.bf16.mxu0 0
    %1193 = vmatmul.mubr.bf16.gmra.mrb[0].mxu0 %v1037
    %v1194 = vpop.f32.mrb[0].mxu0
    %v1195 = vadd.f32 0.0, %v1194
    %v1196 = vpop.f32.mrb[0].mxu0
    %v1197 = vpop.f32.mrb[0].mxu0
    %v1198 = vadd.f32 0.0, %v1197
    %v1199 = vpop.f32.mrb[0].mxu0
    %1200 = vdwg.mxu0
    %s1201 = scalar_lea.vmem [#allocation8], 320
    %v1202 = vld [vmem:[%s1201] sm:$0xf]
    %v1203 = vld [vmem:[%s1201 + $0x4] sm:$0xf]
    %v1204 = vld [vmem:[%s1201 + $0x8] sm:$0xf]
    %v1205 = vld [vmem:[%s1201 + $0xc] sm:$0xf]
    %v1206 = vld [vmem:[%s1201 + $0x10] sm:$0xf]
    %v1207 = vld [vmem:[%s1201 + $0x14] sm:$0xf]
    %v1208 = vld [vmem:[%s1201 + $0x18] sm:$0xf]
    %v1209 = vld [vmem:[%s1201 + $0x1c] sm:$0xf]
    %v1210 = vld [vmem:[%s1201 + $0x20] sm:$0xf]
    %v1211 = vld [vmem:[%s1201 + $0x24] sm:$0xf]
    %v1212 = vld [vmem:[%s1201 + $0x28] sm:$0xf]
    %v1213 = vld [vmem:[%s1201 + $0x2c] sm:$0xf]
    %v1214 = vld [vmem:[%s1201 + $0x30] sm:$0xf]
    %v1215 = vld [vmem:[%s1201 + $0x34] sm:$0xf]
    %v1216 = vld [vmem:[%s1201 + $0x38] sm:$0xf]
    %v1217 = vld [vmem:[%s1201 + $0x3c] sm:$0xf]
    %v1218 = vpack.c.bf16 %v1142, %v1139
    %v1219 = vpack.c.bf16 %v1150, %v1147
    %v1220 = vpack.c.bf16 %v1158, %v1155
    %v1221 = vpack.c.bf16 %v1166, %v1163
    %v1222 = vpack.c.bf16 %v1174, %v1171
    %v1223 = vpack.c.bf16 %v1182, %v1179
    %v1224 = vpack.c.bf16 %v1190, %v1187
    %v1225 = vpack.c.bf16 %v1198, %v1195
    %v1242 = vunpack.c.l.b16 %v1202
    %v1243 = vunpack.c.l.b16 %v1203
    %v1244 = vunpack.c.l.b16 %v1204
    %v1245 = vunpack.c.l.b16 %v1205
    %v1246 = vunpack.c.l.b16 %v1206
    %v1247 = vunpack.c.l.b16 %v1207
    %v1248 = vunpack.c.l.b16 %v1208
    %v1249 = vunpack.c.l.b16 %v1209
    %v1250 = vunpack.c.l.b16 %v1210
    %v1251 = vunpack.c.l.b16 %v1211
    %v1252 = vunpack.c.l.b16 %v1212
    %v1253 = vunpack.c.l.b16 %v1213
    %v1254 = vunpack.c.l.b16 %v1214
    %v1255 = vunpack.c.l.b16 %v1215
    %v1256 = vunpack.c.l.b16 %v1216
    %v1257 = vunpack.c.l.b16 %v1217
    %v1258 = vpack.c.b16 %v1243, %v1242
    %v1259 = vpack.c.b16 %v1245, %v1244
    %v1260 = vpack.c.b16 %v1247, %v1246
    %v1261 = vpack.c.b16 %v1249, %v1248
    %v1262 = vpack.c.b16 %v1251, %v1250
    %v1263 = vpack.c.b16 %v1253, %v1252
    %v1264 = vpack.c.b16 %v1255, %v1254
    %v1265 = vpack.c.b16 %v1257, %v1256
    %1274 = vmatprep.subr.bf16.mxu0 0
    %1275 = vmatpush1.bf16.msra.mxu0 %v1258
    %1276 = vmatprep.subr.bf16.mxu0 0
    %1277 = vmatpush1.bf16.msra.mxu0 %v1259
    %1278 = vmatprep.subr.bf16.mxu0 0
    %1279 = vmatpush1.bf16.msra.mxu0 %v1260
    %1280 = vmatprep.subr.bf16.mxu0 0
    %1281 = vmatpush1.bf16.msra.mxu0 %v1261
    %1282 = vmatprep.subr.bf16.mxu0 0
    %1283 = vmatpush1.bf16.msra.mxu0 %v1262
    %1284 = vmatprep.subr.bf16.mxu0 0
    %1285 = vmatpush1.bf16.msra.mxu0 %v1263
    %1286 = vmatprep.subr.bf16.mxu0 0
    %1287 = vmatpush1.bf16.msra.mxu0 %v1264
    %1288 = vmatprep.subr.bf16.mxu0 0
    %1289 = vmatpush1.bf16.msra.mxu0 %v1265
    %1290 = vmatprep.subr.bf16.mxu0 0
    %1291 = vmatpush1.bf16.msra.mxu0 0
    %1292 = vmatprep.subr.bf16.mxu0 0
    %1293 = vmatpush1.bf16.msra.mxu0 0
    %1294 = vmatprep.subr.bf16.mxu0 0
    %1295 = vmatpush1.bf16.msra.mxu0 0
    %1296 = vmatprep.subr.bf16.mxu0 0
    %1297 = vmatpush1.bf16.msra.mxu0 0
    %1298 = vmatprep.subr.bf16.mxu0 0
    %1299 = vmatpush1.bf16.msra.mxu0 0
    %1300 = vmatprep.subr.bf16.mxu0 0
    %1301 = vmatpush1.bf16.msra.mxu0 0
    %1302 = vmatprep.subr.bf16.mxu0 0
    %1303 = vmatpush1.bf16.msra.mxu0 0
    %1304 = vmatprep.subr.bf16.mxu0 0
    %1305 = vmatpush1.bf16.msra.mxu0 0
    %1306 = vmatprep.mubr.bf16.mxu0 0
    %1307 = vmatmul.mubr.bf16.gmra.mrb[0].mxu0 %v1030
    %v1308 = vpop.f32.mrb[0].mxu0
    %v1309 = vadd.f32 0.0, %v1308
    %v1310 = vpop.f32.mrb[0].mxu0
    %v1311 = vpop.f32.mrb[0].mxu0
    %v1312 = vadd.f32 0.0, %v1311
    %v1313 = vpop.f32.mrb[0].mxu0
    %1314 = vmatprep.mubr.bf16.mxu0 0
    %1315 = vmatmul.mubr.bf16.gmra.mrb[0].mxu0 %v1031
    %v1316 = vpop.f32.mrb[0].mxu0
    %v1317 = vadd.f32 0.0, %v1316
    %v1318 = vpop.f32.mrb[0].mxu0
    %v1319 = vpop.f32.mrb[0].mxu0
    %v1320 = vadd.f32 0.0, %v1319
    %v1321 = vpop.f32.mrb[0].mxu0
    %1322 = vmatprep.mubr.bf16.mxu0 0
    %1323 = vmatmul.mubr.bf16.gmra.mrb[0].mxu0 %v1032
    %v1324 = vpop.f32.mrb[0].mxu0
    %v1325 = vadd.f32 0.0, %v1324
    %v1326 = vpop.f32.mrb[0].mxu0
    %v1327 = vpop.f32.mrb[0].mxu0
    %v1328 = vadd.f32 0.0, %v1327
    %v1329 = vpop.f32.mrb[0].mxu0
    %1330 = vmatprep.mubr.bf16.mxu0 0
    %1331 = vmatmul.mubr.bf16.gmra.mrb[0].mxu0 %v1033
    %v1332 = vpop.f32.mrb[0].mxu0
    %v1333 = vadd.f32 0.0, %v1332
    %v1334 = vpop.f32.mrb[0].mxu0
    %v1335 = vpop.f32.mrb[0].mxu0
    %v1336 = vadd.f32 0.0, %v1335
    %v1337 = vpop.f32.mrb[0].mxu0
    %1338 = vmatprep.mubr.bf16.mxu0 0
    %1339 = vmatmul.mubr.bf16.gmra.mrb[0].mxu0 %v1034
    %v1340 = vpop.f32.mrb[0].mxu0
    %v1341 = vadd.f32 0.0, %v1340
    %v1342 = vpop.f32.mrb[0].mxu0
    %v1343 = vpop.f32.mrb[0].mxu0
    %v1344 = vadd.f32 0.0, %v1343
    %v1345 = vpop.f32.mrb[0].mxu0
    %1346 = vmatprep.mubr.bf16.mxu0 0
    %1347 = vmatmul.mubr.bf16.gmra.mrb[0].mxu0 %v1035
    %v1348 = vpop.f32.mrb[0].mxu0
    %v1349 = vadd.f32 0.0, %v1348
    %v1350 = vpop.f32.mrb[0].mxu0
    %v1351 = vpop.f32.mrb[0].mxu0
    %v1352 = vadd.f32 0.0, %v1351
    %v1353 = vpop.f32.mrb[0].mxu0
    %1354 = vmatprep.mubr.bf16.mxu0 0
    %1355 = vmatmul.mubr.bf16.gmra.mrb[0].mxu0 %v1036
    %v1356 = vpop.f32.mrb[0].mxu0
    %v1357 = vadd.f32 0.0, %v1356
    %v1358 = vpop.f32.mrb[0].mxu0
    %v1359 = vpop.f32.mrb[0].mxu0
    %v1360 = vadd.f32 0.0, %v1359
    %v1361 = vpop.f32.mrb[0].mxu0
    %1362 = vmatprep.mubr.bf16.mxu0 0
    %1363 = vmatmul.mubr.bf16.gmra.mrb[0].mxu0 %v1037
    %v1364 = vpop.f32.mrb[0].mxu0
    %v1365 = vadd.f32 0.0, %v1364
    %v1366 = vpop.f32.mrb[0].mxu0
    %v1367 = vpop.f32.mrb[0].mxu0
    %v1368 = vadd.f32 0.0, %v1367
    %v1369 = vpop.f32.mrb[0].mxu0
    %1370 = vdwg.mxu0
    %1371 = vmatprep.subr.bf16.mxu0 0
    %1372 = vmatpush1.bf16.msra.mxu0 %v1218
    %1373 = vmatprep.subr.bf16.mxu0 0
    %1374 = vmatpush1.bf16.msra.mxu0 %v1219
    %1375 = vmatprep.subr.bf16.mxu0 0
    %1376 = vmatpush1.bf16.msra.mxu0 %v1220
    %1377 = vmatprep.subr.bf16.mxu0 0
    %1378 = vmatpush1.bf16.msra.mxu0 %v1221
    %1379 = vmatprep.subr.bf16.mxu0 0
    %1380 = vmatpush1.bf16.msra.mxu0 %v1222
    %1381 = vmatprep.subr.bf16.mxu0 0
    %1382 = vmatpush1.bf16.msra.mxu0 %v1223
    %1383 = vmatprep.subr.bf16.mxu0 0
    %1384 = vmatpush1.bf16.msra.mxu0 %v1224
    %1385 = vmatprep.subr.bf16.mxu0 0
    %1386 = vmatpush1.bf16.msra.mxu0 %v1225
    %1387 = vmatprep.subr.bf16.mxu0 0
    %1388 = vmatpush1.bf16.msra.mxu0 0
    %1389 = vmatprep.subr.bf16.mxu0 0
    %1390 = vmatpush1.bf16.msra.mxu0 0
    %1391 = vmatprep.subr.bf16.mxu0 0
    %1392 = vmatpush1.bf16.msra.mxu0 0
    %1393 = vmatprep.subr.bf16.mxu0 0
    %1394 = vmatpush1.bf16.msra.mxu0 0
    %1395 = vmatprep.subr.bf16.mxu0 0
    %1396 = vmatpush1.bf16.msra.mxu0 0
    %1397 = vmatprep.subr.bf16.mxu0 0
    %1398 = vmatpush1.bf16.msra.mxu0 0
    %1399 = vmatprep.subr.bf16.mxu0 0
    %1400 = vmatpush1.bf16.msra.mxu0 0
    %1401 = vmatprep.subr.bf16.mxu0 0
    %1402 = vmatpush1.bf16.msra.mxu0 0
    %1403 = vmatprep.mubr.bf16.mxu0 0
    %1404 = vmatmul.mubr.bf16.gmra.mrb[0].mxu0 %v537
    %v1405 = vpop.f32.mrb[0].mxu0
    %v1406 = vadd.f32 %v1309, %v1405
    %v1407 = vpop.f32.mrb[0].mxu0
    %v1408 = vpop.f32.mrb[0].mxu0
    %v1409 = vadd.f32 %v1312, %v1408
    %v1410 = vpop.f32.mrb[0].mxu0
    %1411 = vmatprep.mubr.bf16.mxu0 0
    %1412 = vmatmul.mubr.bf16.gmra.mrb[0].mxu0 %v538
    %v1413 = vpop.f32.mrb[0].mxu0
    %v1414 = vadd.f32 %v1317, %v1413
    %v1415 = vpop.f32.mrb[0].mxu0
    %v1416 = vpop.f32.mrb[0].mxu0
    %v1417 = vadd.f32 %v1320, %v1416
    %v1418 = vpop.f32.mrb[0].mxu0
    %1419 = vmatprep.mubr.bf16.mxu0 0
    %1420 = vmatmul.mubr.bf16.gmra.mrb[0].mxu0 %v539
    %v1421 = vpop.f32.mrb[0].mxu0
    %v1422 = vadd.f32 %v1325, %v1421
    %v1423 = vpop.f32.mrb[0].mxu0
    %v1424 = vpop.f32.mrb[0].mxu0
    %v1425 = vadd.f32 %v1328, %v1424
    %v1426 = vpop.f32.mrb[0].mxu0
    %1427 = vmatprep.mubr.bf16.mxu0 0
    %1428 = vmatmul.mubr.bf16.gmra.mrb[0].mxu0 %v540
    %v1429 = vpop.f32.mrb[0].mxu0
    %v1430 = vadd.f32 %v1333, %v1429
    %v1431 = vpop.f32.mrb[0].mxu0
    %v1432 = vpop.f32.mrb[0].mxu0
    %v1433 = vadd.f32 %v1336, %v1432
    %v1434 = vpop.f32.mrb[0].mxu0
    %1435 = vmatprep.mubr.bf16.mxu0 0
    %1436 = vmatmul.mubr.bf16.gmra.mrb[0].mxu0 %v541
    %v1437 = vpop.f32.mrb[0].mxu0
    %v1438 = vadd.f32 %v1341, %v1437
    %v1439 = vpop.f32.mrb[0].mxu0
    %v1440 = vpop.f32.mrb[0].mxu0
    %v1441 = vadd.f32 %v1344, %v1440
    %v1442 = vpop.f32.mrb[0].mxu0
    %1443 = vmatprep.mubr.bf16.mxu0 0
    %1444 = vmatmul.mubr.bf16.gmra.mrb[0].mxu0 %v542
    %v1445 = vpop.f32.mrb[0].mxu0
    %v1446 = vadd.f32 %v1349, %v1445
    %v1447 = vpop.f32.mrb[0].mxu0
    %v1448 = vpop.f32.mrb[0].mxu0
    %v1449 = vadd.f32 %v1352, %v1448
    %v1450 = vpop.f32.mrb[0].mxu0
    %1451 = vmatprep.mubr.bf16.mxu0 0
    %1452 = vmatmul.mubr.bf16.gmra.mrb[0].mxu0 %v543
    %v1453 = vpop.f32.mrb[0].mxu0
    %v1454 = vadd.f32 %v1357, %v1453
    %v1455 = vpop.f32.mrb[0].mxu0
    %v1456 = vpop.f32.mrb[0].mxu0
    %v1457 = vadd.f32 %v1360, %v1456
    %v1458 = vpop.f32.mrb[0].mxu0
    %1459 = vmatprep.mubr.bf16.mxu0 0
    %1460 = vmatmul.mubr.bf16.gmra.mrb[0].mxu0 %v544
    %v1461 = vpop.f32.mrb[0].mxu0
    %v1462 = vadd.f32 %v1365, %v1461
    %v1463 = vpop.f32.mrb[0].mxu0
    %v1464 = vpop.f32.mrb[0].mxu0
    %v1465 = vadd.f32 %v1368, %v1464
    %v1466 = vpop.f32.mrb[0].mxu0
    %1467 = vdwg.mxu0
    %v1468 = vlaneseq
    %v1469 = vshrl.u32 %v1468, 7
    %v1470 = vsub.s32 0, %v1469
    %v1471 = vrot.slane %v1055, %v1470
    %v1472 = vadd.f32 %v1406, %v1471
    %v1473 = vadd.f32 %v1409, %v1471
    %v1474 = vadd.f32 %v1414, %v1471
    %v1475 = vadd.f32 %v1417, %v1471
    %v1476 = vadd.f32 %v1422, %v1471
    %v1477 = vadd.f32 %v1425, %v1471
    %v1478 = vadd.f32 %v1430, %v1471
    %v1479 = vadd.f32 %v1433, %v1471
    %v1480 = vadd.f32 %v1438, %v1471
    %v1481 = vadd.f32 %v1441, %v1471
    %v1482 = vadd.f32 %v1446, %v1471
    %v1483 = vadd.f32 %v1449, %v1471
    %v1484 = vadd.f32 %v1454, %v1471
    %v1485 = vadd.f32 %v1457, %v1471
    %v1486 = vadd.f32 %v1462, %v1471
    %v1487 = vadd.f32 %v1465, %v1471
    %v1488 = vmax.f32 %v1472, 0.0
    %v1489 = vmax.f32 %v1473, 0.0
    %v1490 = vmax.f32 %v1474, 0.0
    %v1491 = vmax.f32 %v1475, 0.0
    %v1492 = vmax.f32 %v1476, 0.0
    %v1493 = vmax.f32 %v1477, 0.0
    %v1494 = vmax.f32 %v1478, 0.0
    %v1495 = vmax.f32 %v1479, 0.0
    %v1496 = vmax.f32 %v1480, 0.0
    %v1497 = vmax.f32 %v1481, 0.0
    %v1498 = vmax.f32 %v1482, 0.0
    %v1499 = vmax.f32 %v1483, 0.0
    %v1500 = vmax.f32 %v1484, 0.0
    %v1501 = vmax.f32 %v1485, 0.0
    %v1502 = vmax.f32 %v1486, 0.0
    %v1503 = vmax.f32 %v1487, 0.0
    %v1504 = vpack.c.bf16 %v1489, %v1488
    %v1505 = vpack.c.bf16 %v1491, %v1490
    %v1506 = vpack.c.bf16 %v1493, %v1492
    %v1507 = vpack.c.bf16 %v1495, %v1494
    %v1508 = vpack.c.bf16 %v1497, %v1496
    %v1509 = vpack.c.bf16 %v1499, %v1498
    %v1510 = vpack.c.bf16 %v1501, %v1500
    %v1511 = vpack.c.bf16 %v1503, %v1502
    %s1512 = scalar_lea.vmem [#allocation8], 384
    %v1513 = vld [vmem:[%s1512] sm:$0xf]
    %v1514 = vld [vmem:[%s1512 + $0x4] sm:$0xf]
    %v1515 = vld [vmem:[%s1512 + $0x8] sm:$0xf]
    %v1516 = vld [vmem:[%s1512 + $0xc] sm:$0xf]
    %v1517 = vld [vmem:[%s1512 + $0x10] sm:$0xf]
    %v1518 = vld [vmem:[%s1512 + $0x14] sm:$0xf]
    %v1519 = vld [vmem:[%s1512 + $0x18] sm:$0xf]
    %v1520 = vld [vmem:[%s1512 + $0x1c] sm:$0xf]
    %v1521 = vld [vmem:[%s1512 + $0x20] sm:$0xf]
    %v1522 = vld [vmem:[%s1512 + $0x24] sm:$0xf]
    %v1523 = vld [vmem:[%s1512 + $0x28] sm:$0xf]
    %v1524 = vld [vmem:[%s1512 + $0x2c] sm:$0xf]
    %v1525 = vld [vmem:[%s1512 + $0x30] sm:$0xf]
    %v1526 = vld [vmem:[%s1512 + $0x34] sm:$0xf]
    %v1527 = vld [vmem:[%s1512 + $0x38] sm:$0xf]
    %v1528 = vld [vmem:[%s1512 + $0x3c] sm:$0xf]
    %v1529 = vld [vmem:[%s4 + $0x3] sm:$0x1]
    %v1546 = vunpack.c.l.b16 %v1513
    %v1547 = vunpack.c.l.b16 %v1514
    %v1548 = vunpack.c.l.b16 %v1515
    %v1549 = vunpack.c.l.b16 %v1516
    %v1550 = vunpack.c.l.b16 %v1517
    %v1551 = vunpack.c.l.b16 %v1518
    %v1552 = vunpack.c.l.b16 %v1519
    %v1553 = vunpack.c.l.b16 %v1520
    %v1554 = vunpack.c.l.b16 %v1521
    %v1555 = vunpack.c.l.b16 %v1522
    %v1556 = vunpack.c.l.b16 %v1523
    %v1557 = vunpack.c.l.b16 %v1524
    %v1558 = vunpack.c.l.b16 %v1525
    %v1559 = vunpack.c.l.b16 %v1526
    %v1560 = vunpack.c.l.b16 %v1527
    %v1561 = vunpack.c.l.b16 %v1528
    %v1562 = vpack.c.b16 %v1547, %v1546
    %v1563 = vpack.c.b16 %v1549, %v1548
    %v1564 = vpack.c.b16 %v1551, %v1550
    %v1565 = vpack.c.b16 %v1553, %v1552
    %v1566 = vpack.c.b16 %v1555, %v1554
    %v1567 = vpack.c.b16 %v1557, %v1556
    %v1568 = vpack.c.b16 %v1559, %v1558
    %v1569 = vpack.c.b16 %v1561, %v1560
    %1578 = vmatprep.subr.bf16.mxu0 0
    %1579 = vmatpush1.bf16.msra.mxu0 %v1562
    %1580 = vmatprep.subr.bf16.mxu0 0
    %1581 = vmatpush1.bf16.msra.mxu0 %v1563
    %1582 = vmatprep.subr.bf16.mxu0 0
    %1583 = vmatpush1.bf16.msra.mxu0 %v1564
    %1584 = vmatprep.subr.bf16.mxu0 0
    %1585 = vmatpush1.bf16.msra.mxu0 %v1565
    %1586 = vmatprep.subr.bf16.mxu0 0
    %1587 = vmatpush1.bf16.msra.mxu0 %v1566
    %1588 = vmatprep.subr.bf16.mxu0 0
    %1589 = vmatpush1.bf16.msra.mxu0 %v1567
    %1590 = vmatprep.subr.bf16.mxu0 0
    %1591 = vmatpush1.bf16.msra.mxu0 %v1568
    %1592 = vmatprep.subr.bf16.mxu0 0
    %1593 = vmatpush1.bf16.msra.mxu0 %v1569
    %1594 = vmatprep.subr.bf16.mxu0 0
    %1595 = vmatpush1.bf16.msra.mxu0 0
    %1596 = vmatprep.subr.bf16.mxu0 0
    %1597 = vmatpush1.bf16.msra.mxu0 0
    %1598 = vmatprep.subr.bf16.mxu0 0
    %1599 = vmatpush1.bf16.msra.mxu0 0
    %1600 = vmatprep.subr.bf16.mxu0 0
    %1601 = vmatpush1.bf16.msra.mxu0 0
    %1602 = vmatprep.subr.bf16.mxu0 0
    %1603 = vmatpush1.bf16.msra.mxu0 0
    %1604 = vmatprep.subr.bf16.mxu0 0
    %1605 = vmatpush1.bf16.msra.mxu0 0
    %1606 = vmatprep.subr.bf16.mxu0 0
    %1607 = vmatpush1.bf16.msra.mxu0 0
    %1608 = vmatprep.subr.bf16.mxu0 0
    %1609 = vmatpush1.bf16.msra.mxu0 0
    %1610 = vmatprep.mubr.bf16.mxu0 0
    %1611 = vmatmul.mubr.bf16.gmra.mrb[0].mxu0 %v1504
    %v1612 = vpop.f32.mrb[0].mxu0
    %v1613 = vadd.f32 0.0, %v1612
    %v1614 = vpop.f32.mrb[0].mxu0
    %v1615 = vpop.f32.mrb[0].mxu0
    %v1616 = vadd.f32 0.0, %v1615
    %v1617 = vpop.f32.mrb[0].mxu0
    %1618 = vmatprep.mubr.bf16.mxu0 0
    %1619 = vmatmul.mubr.bf16.gmra.mrb[0].mxu0 %v1505
    %v1620 = vpop.f32.mrb[0].mxu0
    %v1621 = vadd.f32 0.0, %v1620
    %v1622 = vpop.f32.mrb[0].mxu0
    %v1623 = vpop.f32.mrb[0].mxu0
    %v1624 = vadd.f32 0.0, %v1623
    %v1625 = vpop.f32.mrb[0].mxu0
    %1626 = vmatprep.mubr.bf16.mxu0 0
    %1627 = vmatmul.mubr.bf16.gmra.mrb[0].mxu0 %v1506
    %v1628 = vpop.f32.mrb[0].mxu0
    %v1629 = vadd.f32 0.0, %v1628
    %v1630 = vpop.f32.mrb[0].mxu0
    %v1631 = vpop.f32.mrb[0].mxu0
    %v1632 = vadd.f32 0.0, %v1631
    %v1633 = vpop.f32.mrb[0].mxu0
    %1634 = vmatprep.mubr.bf16.mxu0 0
    %1635 = vmatmul.mubr.bf16.gmra.mrb[0].mxu0 %v1507
    %v1636 = vpop.f32.mrb[0].mxu0
    %v1637 = vadd.f32 0.0, %v1636
    %v1638 = vpop.f32.mrb[0].mxu0
    %v1639 = vpop.f32.mrb[0].mxu0
    %v1640 = vadd.f32 0.0, %v1639
    %v1641 = vpop.f32.mrb[0].mxu0
    %1642 = vmatprep.mubr.bf16.mxu0 0
    %1643 = vmatmul.mubr.bf16.gmra.mrb[0].mxu0 %v1508
    %v1644 = vpop.f32.mrb[0].mxu0
    %v1645 = vadd.f32 0.0, %v1644
    %v1646 = vpop.f32.mrb[0].mxu0
    %v1647 = vpop.f32.mrb[0].mxu0
    %v1648 = vadd.f32 0.0, %v1647
    %v1649 = vpop.f32.mrb[0].mxu0
    %1650 = vmatprep.mubr.bf16.mxu0 0
    %1651 = vmatmul.mubr.bf16.gmra.mrb[0].mxu0 %v1509
    %v1652 = vpop.f32.mrb[0].mxu0
    %v1653 = vadd.f32 0.0, %v1652
    %v1654 = vpop.f32.mrb[0].mxu0
    %v1655 = vpop.f32.mrb[0].mxu0
    %v1656 = vadd.f32 0.0, %v1655
    %v1657 = vpop.f32.mrb[0].mxu0
    %1658 = vmatprep.mubr.bf16.mxu0 0
    %1659 = vmatmul.mubr.bf16.gmra.mrb[0].mxu0 %v1510
    %v1660 = vpop.f32.mrb[0].mxu0
    %v1661 = vadd.f32 0.0, %v1660
    %v1662 = vpop.f32.mrb[0].mxu0
    %v1663 = vpop.f32.mrb[0].mxu0
    %v1664 = vadd.f32 0.0, %v1663
    %v1665 = vpop.f32.mrb[0].mxu0
    %1666 = vmatprep.mubr.bf16.mxu0 0
    %1667 = vmatmul.mubr.bf16.gmra.mrb[0].mxu0 %v1511
    %v1668 = vpop.f32.mrb[0].mxu0
    %v1669 = vadd.f32 0.0, %v1668
    %v1670 = vpop.f32.mrb[0].mxu0
    %v1671 = vpop.f32.mrb[0].mxu0
    %v1672 = vadd.f32 0.0, %v1671
    %v1673 = vpop.f32.mrb[0].mxu0
    %1674 = vdwg.mxu0
    %s1675 = scalar_lea.vmem [#allocation8], 448
    %v1676 = vld [vmem:[%s1675] sm:$0xf]
    %v1677 = vld [vmem:[%s1675 + $0x4] sm:$0xf]
    %v1678 = vld [vmem:[%s1675 + $0x8] sm:$0xf]
    %v1679 = vld [vmem:[%s1675 + $0xc] sm:$0xf]
    %v1680 = vld [vmem:[%s1675 + $0x10] sm:$0xf]
    %v1681 = vld [vmem:[%s1675 + $0x14] sm:$0xf]
    %v1682 = vld [vmem:[%s1675 + $0x18] sm:$0xf]
    %v1683 = vld [vmem:[%s1675 + $0x1c] sm:$0xf]
    %v1684 = vld [vmem:[%s1675 + $0x20] sm:$0xf]
    %v1685 = vld [vmem:[%s1675 + $0x24] sm:$0xf]
    %v1686 = vld [vmem:[%s1675 + $0x28] sm:$0xf]
    %v1687 = vld [vmem:[%s1675 + $0x2c] sm:$0xf]
    %v1688 = vld [vmem:[%s1675 + $0x30] sm:$0xf]
    %v1689 = vld [vmem:[%s1675 + $0x34] sm:$0xf]
    %v1690 = vld [vmem:[%s1675 + $0x38] sm:$0xf]
    %v1691 = vld [vmem:[%s1675 + $0x3c] sm:$0xf]
    %v1692 = vpack.c.bf16 %v1616, %v1613
    %v1693 = vpack.c.bf16 %v1624, %v1621
    %v1694 = vpack.c.bf16 %v1632, %v1629
    %v1695 = vpack.c.bf16 %v1640, %v1637
    %v1696 = vpack.c.bf16 %v1648, %v1645
    %v1697 = vpack.c.bf16 %v1656, %v1653
    %v1698 = vpack.c.bf16 %v1664, %v1661
    %v1699 = vpack.c.bf16 %v1672, %v1669
    %v1716 = vunpack.c.l.b16 %v1676
    %v1717 = vunpack.c.l.b16 %v1677
    %v1718 = vunpack.c.l.b16 %v1678
    %v1719 = vunpack.c.l.b16 %v1679
    %v1720 = vunpack.c.l.b16 %v1680
    %v1721 = vunpack.c.l.b16 %v1681
    %v1722 = vunpack.c.l.b16 %v1682
    %v1723 = vunpack.c.l.b16 %v1683
    %v1724 = vunpack.c.l.b16 %v1684
    %v1725 = vunpack.c.l.b16 %v1685
    %v1726 = vunpack.c.l.b16 %v1686
    %v1727 = vunpack.c.l.b16 %v1687
    %v1728 = vunpack.c.l.b16 %v1688
    %v1729 = vunpack.c.l.b16 %v1689
    %v1730 = vunpack.c.l.b16 %v1690
    %v1731 = vunpack.c.l.b16 %v1691
    %v1732 = vpack.c.b16 %v1717, %v1716
    %v1733 = vpack.c.b16 %v1719, %v1718
    %v1734 = vpack.c.b16 %v1721, %v1720
    %v1735 = vpack.c.b16 %v1723, %v1722
    %v1736 = vpack.c.b16 %v1725, %v1724
    %v1737 = vpack.c.b16 %v1727, %v1726
    %v1738 = vpack.c.b16 %v1729, %v1728
    %v1739 = vpack.c.b16 %v1731, %v1730
    %1748 = vmatprep.subr.bf16.mxu0 0
    %1749 = vmatpush1.bf16.msra.mxu0 %v1732
    %1750 = vmatprep.subr.bf16.mxu0 0
    %1751 = vmatpush1.bf16.msra.mxu0 %v1733
    %1752 = vmatprep.subr.bf16.mxu0 0
    %1753 = vmatpush1.bf16.msra.mxu0 %v1734
    %1754 = vmatprep.subr.bf16.mxu0 0
    %1755 = vmatpush1.bf16.msra.mxu0 %v1735
    %1756 = vmatprep.subr.bf16.mxu0 0
    %1757 = vmatpush1.bf16.msra.mxu0 %v1736
    %1758 = vmatprep.subr.bf16.mxu0 0
    %1759 = vmatpush1.bf16.msra.mxu0 %v1737
    %1760 = vmatprep.subr.bf16.mxu0 0
    %1761 = vmatpush1.bf16.msra.mxu0 %v1738
    %1762 = vmatprep.subr.bf16.mxu0 0
    %1763 = vmatpush1.bf16.msra.mxu0 %v1739
    %1764 = vmatprep.subr.bf16.mxu0 0
    %1765 = vmatpush1.bf16.msra.mxu0 0
    %1766 = vmatprep.subr.bf16.mxu0 0
    %1767 = vmatpush1.bf16.msra.mxu0 0
    %1768 = vmatprep.subr.bf16.mxu0 0
    %1769 = vmatpush1.bf16.msra.mxu0 0
    %1770 = vmatprep.subr.bf16.mxu0 0
    %1771 = vmatpush1.bf16.msra.mxu0 0
    %1772 = vmatprep.subr.bf16.mxu0 0
    %1773 = vmatpush1.bf16.msra.mxu0 0
    %1774 = vmatprep.subr.bf16.mxu0 0
    %1775 = vmatpush1.bf16.msra.mxu0 0
    %1776 = vmatprep.subr.bf16.mxu0 0
    %1777 = vmatpush1.bf16.msra.mxu0 0
    %1778 = vmatprep.subr.bf16.mxu0 0
    %1779 = vmatpush1.bf16.msra.mxu0 0
    %1780 = vmatprep.mubr.bf16.mxu0 0
    %1781 = vmatmul.mubr.bf16.gmra.mrb[0].mxu0 %v1504
    %v1782 = vpop.f32.mrb[0].mxu0
    %v1783 = vadd.f32 0.0, %v1782
    %v1784 = vpop.f32.mrb[0].mxu0
    %v1785 = vpop.f32.mrb[0].mxu0
    %v1786 = vadd.f32 0.0, %v1785
    %v1787 = vpop.f32.mrb[0].mxu0
    %1788 = vmatprep.mubr.bf16.mxu0 0
    %1789 = vmatmul.mubr.bf16.gmra.mrb[0].mxu0 %v1505
    %v1790 = vpop.f32.mrb[0].mxu0
    %v1791 = vadd.f32 0.0, %v1790
    %v1792 = vpop.f32.mrb[0].mxu0
    %v1793 = vpop.f32.mrb[0].mxu0
    %v1794 = vadd.f32 0.0, %v1793
    %v1795 = vpop.f32.mrb[0].mxu0
    %1796 = vmatprep.mubr.bf16.mxu0 0
    %1797 = vmatmul.mubr.bf16.gmra.mrb[0].mxu0 %v1506
    %v1798 = vpop.f32.mrb[0].mxu0
    %v1799 = vadd.f32 0.0, %v1798
    %v1800 = vpop.f32.mrb[0].mxu0
    %v1801 = vpop.f32.mrb[0].mxu0
    %v1802 = vadd.f32 0.0, %v1801
    %v1803 = vpop.f32.mrb[0].mxu0
    %1804 = vmatprep.mubr.bf16.mxu0 0
    %1805 = vmatmul.mubr.bf16.gmra.mrb[0].mxu0 %v1507
    %v1806 = vpop.f32.mrb[0].mxu0
    %v1807 = vadd.f32 0.0, %v1806
    %v1808 = vpop.f32.mrb[0].mxu0
    %v1809 = vpop.f32.mrb[0].mxu0
    %v1810 = vadd.f32 0.0, %v1809
    %v1811 = vpop.f32.mrb[0].mxu0
    %1812 = vmatprep.mubr.bf16.mxu0 0
    %1813 = vmatmul.mubr.bf16.gmra.mrb[0].mxu0 %v1508
    %v1814 = vpop.f32.mrb[0].mxu0
    %v1815 = vadd.f32 0.0, %v1814
    %v1816 = vpop.f32.mrb[0].mxu0
    %v1817 = vpop.f32.mrb[0].mxu0
    %v1818 = vadd.f32 0.0, %v1817
    %v1819 = vpop.f32.mrb[0].mxu0
    %1820 = vmatprep.mubr.bf16.mxu0 0
    %1821 = vmatmul.mubr.bf16.gmra.mrb[0].mxu0 %v1509
    %v1822 = vpop.f32.mrb[0].mxu0
    %v1823 = vadd.f32 0.0, %v1822
    %v1824 = vpop.f32.mrb[0].mxu0
    %v1825 = vpop.f32.mrb[0].mxu0
    %v1826 = vadd.f32 0.0, %v1825
    %v1827 = vpop.f32.mrb[0].mxu0
    %1828 = vmatprep.mubr.bf16.mxu0 0
    %1829 = vmatmul.mubr.bf16.gmra.mrb[0].mxu0 %v1510
    %v1830 = vpop.f32.mrb[0].mxu0
    %v1831 = vadd.f32 0.0, %v1830
    %v1832 = vpop.f32.mrb[0].mxu0
    %v1833 = vpop.f32.mrb[0].mxu0
    %v1834 = vadd.f32 0.0, %v1833
    %v1835 = vpop.f32.mrb[0].mxu0
    %1836 = vmatprep.mubr.bf16.mxu0 0
    %1837 = vmatmul.mubr.bf16.gmra.mrb[0].mxu0 %v1511
    %v1838 = vpop.f32.mrb[0].mxu0
    %v1839 = vadd.f32 0.0, %v1838
    %v1840 = vpop.f32.mrb[0].mxu0
    %v1841 = vpop.f32.mrb[0].mxu0
    %v1842 = vadd.f32 0.0, %v1841
    %v1843 = vpop.f32.mrb[0].mxu0
    %1844 = vdwg.mxu0
    %1845 = vmatprep.subr.bf16.mxu0 0
    %1846 = vmatpush1.bf16.msra.mxu0 %v1692
    %1847 = vmatprep.subr.bf16.mxu0 0
    %1848 = vmatpush1.bf16.msra.mxu0 %v1693
    %1849 = vmatprep.subr.bf16.mxu0 0
    %1850 = vmatpush1.bf16.msra.mxu0 %v1694
    %1851 = vmatprep.subr.bf16.mxu0 0
    %1852 = vmatpush1.bf16.msra.mxu0 %v1695
    %1853 = vmatprep.subr.bf16.mxu0 0
    %1854 = vmatpush1.bf16.msra.mxu0 %v1696
    %1855 = vmatprep.subr.bf16.mxu0 0
    %1856 = vmatpush1.bf16.msra.mxu0 %v1697
    %1857 = vmatprep.subr.bf16.mxu0 0
    %1858 = vmatpush1.bf16.msra.mxu0 %v1698
    %1859 = vmatprep.subr.bf16.mxu0 0
    %1860 = vmatpush1.bf16.msra.mxu0 %v1699
    %1861 = vmatprep.subr.bf16.mxu0 0
    %1862 = vmatpush1.bf16.msra.mxu0 0
    %1863 = vmatprep.subr.bf16.mxu0 0
    %1864 = vmatpush1.bf16.msra.mxu0 0
    %1865 = vmatprep.subr.bf16.mxu0 0
    %1866 = vmatpush1.bf16.msra.mxu0 0
    %1867 = vmatprep.subr.bf16.mxu0 0
    %1868 = vmatpush1.bf16.msra.mxu0 0
    %1869 = vmatprep.subr.bf16.mxu0 0
    %1870 = vmatpush1.bf16.msra.mxu0 0
    %1871 = vmatprep.subr.bf16.mxu0 0
    %1872 = vmatpush1.bf16.msra.mxu0 0
    %1873 = vmatprep.subr.bf16.mxu0 0
    %1874 = vmatpush1.bf16.msra.mxu0 0
    %1875 = vmatprep.subr.bf16.mxu0 0
    %1876 = vmatpush1.bf16.msra.mxu0 0
    %1877 = vmatprep.mubr.bf16.mxu0 0
    %1878 = vmatmul.mubr.bf16.gmra.mrb[0].mxu0 %v537
    %v1879 = vpop.f32.mrb[0].mxu0
    %v1880 = vadd.f32 %v1783, %v1879
    %v1881 = vpop.f32.mrb[0].mxu0
    %v1882 = vpop.f32.mrb[0].mxu0
    %v1883 = vadd.f32 %v1786, %v1882
    %v1884 = vpop.f32.mrb[0].mxu0
    %1885 = vmatprep.mubr.bf16.mxu0 0
    %1886 = vmatmul.mubr.bf16.gmra.mrb[0].mxu0 %v538
    %v1887 = vpop.f32.mrb[0].mxu0
    %v1888 = vadd.f32 %v1791, %v1887
    %v1889 = vpop.f32.mrb[0].mxu0
    %v1890 = vpop.f32.mrb[0].mxu0
    %v1891 = vadd.f32 %v1794, %v1890
    %v1892 = vpop.f32.mrb[0].mxu0
    %1893 = vmatprep.mubr.bf16.mxu0 0
    %1894 = vmatmul.mubr.bf16.gmra.mrb[0].mxu0 %v539
    %v1895 = vpop.f32.mrb[0].mxu0
    %v1896 = vadd.f32 %v1799, %v1895
    %v1897 = vpop.f32.mrb[0].mxu0
    %v1898 = vpop.f32.mrb[0].mxu0
    %v1899 = vadd.f32 %v1802, %v1898
    %v1900 = vpop.f32.mrb[0].mxu0
    %1901 = vmatprep.mubr.bf16.mxu0 0
    %1902 = vmatmul.mubr.bf16.gmra.mrb[0].mxu0 %v540
    %v1903 = vpop.f32.mrb[0].mxu0
    %v1904 = vadd.f32 %v1807, %v1903
    %v1905 = vpop.f32.mrb[0].mxu0
    %v1906 = vpop.f32.mrb[0].mxu0
    %v1907 = vadd.f32 %v1810, %v1906
    %v1908 = vpop.f32.mrb[0].mxu0
    %1909 = vmatprep.mubr.bf16.mxu0 0
    %1910 = vmatmul.mubr.bf16.gmra.mrb[0].mxu0 %v541
    %v1911 = vpop.f32.mrb[0].mxu0
    %v1912 = vadd.f32 %v1815, %v1911
    %v1913 = vpop.f32.mrb[0].mxu0
    %v1914 = vpop.f32.mrb[0].mxu0
    %v1915 = vadd.f32 %v1818, %v1914
    %v1916 = vpop.f32.mrb[0].mxu0
    %1917 = vmatprep.mubr.bf16.mxu0 0
    %1918 = vmatmul.mubr.bf16.gmra.mrb[0].mxu0 %v542
    %v1919 = vpop.f32.mrb[0].mxu0
    %v1920 = vadd.f32 %v1823, %v1919
    %v1921 = vpop.f32.mrb[0].mxu0
    %v1922 = vpop.f32.mrb[0].mxu0
    %v1923 = vadd.f32 %v1826, %v1922
    %v1924 = vpop.f32.mrb[0].mxu0
    %1925 = vmatprep.mubr.bf16.mxu0 0
    %1926 = vmatmul.mubr.bf16.gmra.mrb[0].mxu0 %v543
    %v1927 = vpop.f32.mrb[0].mxu0
    %v1928 = vadd.f32 %v1831, %v1927
    %v1929 = vpop.f32.mrb[0].mxu0
    %v1930 = vpop.f32.mrb[0].mxu0
    %v1931 = vadd.f32 %v1834, %v1930
    %v1932 = vpop.f32.mrb[0].mxu0
    %1933 = vmatprep.mubr.bf16.mxu0 0
    %1934 = vmatmul.mubr.bf16.gmra.mrb[0].mxu0 %v544
    %v1935 = vpop.f32.mrb[0].mxu0
    %v1936 = vadd.f32 %v1839, %v1935
    %v1937 = vpop.f32.mrb[0].mxu0
    %v1938 = vpop.f32.mrb[0].mxu0
    %v1939 = vadd.f32 %v1842, %v1938
    %v1940 = vpop.f32.mrb[0].mxu0
    %1941 = vdwg.mxu0
    %v1942 = vlaneseq
    %v1943 = vshrl.u32 %v1942, 7
    %v1944 = vsub.s32 0, %v1943
    %v1945 = vrot.slane %v1529, %v1944
    %v1946 = vadd.f32 %v1880, %v1945
    %v1947 = vadd.f32 %v1883, %v1945
    %v1948 = vadd.f32 %v1888, %v1945
    %v1949 = vadd.f32 %v1891, %v1945
    %v1950 = vadd.f32 %v1896, %v1945
    %v1951 = vadd.f32 %v1899, %v1945
    %v1952 = vadd.f32 %v1904, %v1945
    %v1953 = vadd.f32 %v1907, %v1945
    %v1954 = vadd.f32 %v1912, %v1945
    %v1955 = vadd.f32 %v1915, %v1945
    %v1956 = vadd.f32 %v1920, %v1945
    %v1957 = vadd.f32 %v1923, %v1945
    %v1958 = vadd.f32 %v1928, %v1945
    %v1959 = vadd.f32 %v1931, %v1945
    %v1960 = vadd.f32 %v1936, %v1945
    %v1961 = vadd.f32 %v1939, %v1945
    %v1962 = vlaneseq
    %v1963 = vand.u32 %v1962, 127
    %vm1964 = vcmp.lt.s32.totalorder %v1963, 8
    %v1965 = vsel %vm1964, %v1946, -1e+30
    %v1966 = vsel %vm1964, %v1947, -1e+30
    %v1967 = vsel %vm1964, %v1948, -1e+30
    %v1968 = vsel %vm1964, %v1949, -1e+30
    %v1969 = vsel %vm1964, %v1950, -1e+30
    %v1970 = vsel %vm1964, %v1951, -1e+30
    %v1971 = vsel %vm1964, %v1952, -1e+30
    %v1972 = vsel %vm1964, %v1953, -1e+30
    %v1973 = vsel %vm1964, %v1954, -1e+30
    %v1974 = vsel %vm1964, %v1955, -1e+30
    %v1975 = vsel %vm1964, %v1956, -1e+30
    %v1976 = vsel %vm1964, %v1957, -1e+30
    %v1977 = vsel %vm1964, %v1958, -1e+30
    %v1978 = vsel %vm1964, %v1959, -1e+30
    %v1979 = vsel %vm1964, %v1960, -1e+30
    %v1980 = vsel %vm1964, %v1961, -1e+30
    %1981 = vmax.xlane.f32.xlu0 %v1965
    %v1982 = vpop.xlane.xlu0 %1981
    %1983 = vmax.xlane.f32.xlu0 %v1966
    %v1984 = vpop.xlane.xlu0 %1983
    %1985 = vmax.xlane.f32.xlu0 %v1967
    %v1986 = vpop.xlane.xlu0 %1985
    %1987 = vmax.xlane.f32.xlu0 %v1968
    %v1988 = vpop.xlane.xlu0 %1987
    %1989 = vmax.xlane.f32.xlu0 %v1969
    %v1990 = vpop.xlane.xlu0 %1989
    %1991 = vmax.xlane.f32.xlu0 %v1970
    %v1992 = vpop.xlane.xlu0 %1991
    %1993 = vmax.xlane.f32.xlu0 %v1971
    %v1994 = vpop.xlane.xlu0 %1993
    %1995 = vmax.xlane.f32.xlu0 %v1972
    %v1996 = vpop.xlane.xlu0 %1995
    %1997 = vmax.xlane.f32.xlu0 %v1973
    %v1998 = vpop.xlane.xlu0 %1997
    %1999 = vmax.xlane.f32.xlu0 %v1974
    %v2000 = vpop.xlane.xlu0 %1999
    %2001 = vmax.xlane.f32.xlu0 %v1975
    %v2002 = vpop.xlane.xlu0 %2001
    %2003 = vmax.xlane.f32.xlu0 %v1976
    %v2004 = vpop.xlane.xlu0 %2003
    %2005 = vmax.xlane.f32.xlu0 %v1977
    %v2006 = vpop.xlane.xlu0 %2005
    %2007 = vmax.xlane.f32.xlu0 %v1978
    %v2008 = vpop.xlane.xlu0 %2007
    %2009 = vmax.xlane.f32.xlu0 %v1979
    %v2010 = vpop.xlane.xlu0 %2009
    %2011 = vmax.xlane.f32.xlu0 %v1980
    %v2012 = vpop.xlane.xlu0 %2011
    %v2013 = vsub.f32 %v1965, %v1982
    %v2014 = vsub.f32 %v1966, %v1984
    %v2015 = vsub.f32 %v1967, %v1986
    %v2016 = vsub.f32 %v1968, %v1988
    %v2017 = vsub.f32 %v1969, %v1990
    %v2018 = vsub.f32 %v1970, %v1992
    %v2019 = vsub.f32 %v1971, %v1994
    %v2020 = vsub.f32 %v1972, %v1996
    %v2021 = vsub.f32 %v1973, %v1998
    %v2022 = vsub.f32 %v1974, %v2000
    %v2023 = vsub.f32 %v1975, %v2002
    %v2024 = vsub.f32 %v1976, %v2004
    %v2025 = vsub.f32 %v1977, %v2006
    %v2026 = vsub.f32 %v1978, %v2008
    %v2027 = vsub.f32 %v1979, %v2010
    %v2028 = vsub.f32 %v1980, %v2012
    %v2029 = vmul.f32 %v2013, 1.442695
    %v2030 = vpow.pop %v2029
    %v2031 = vmul.f32 %v2014, 1.442695
    %v2032 = vpow.pop %v2031
    %v2033 = vmul.f32 %v2015, 1.442695
    %v2034 = vpow.pop %v2033
    %v2035 = vmul.f32 %v2016, 1.442695
    %v2036 = vpow.pop %v2035
    %v2037 = vmul.f32 %v2017, 1.442695
    %v2038 = vpow.pop %v2037
    %v2039 = vmul.f32 %v2018, 1.442695
    %v2040 = vpow.pop %v2039
    %v2041 = vmul.f32 %v2019, 1.442695
    %v2042 = vpow.pop %v2041
    %v2043 = vmul.f32 %v2020, 1.442695
    %v2044 = vpow.pop %v2043
    %v2045 = vmul.f32 %v2021, 1.442695
    %v2046 = vpow.pop %v2045
    %v2047 = vmul.f32 %v2022, 1.442695
    %v2048 = vpow.pop %v2047
    %v2049 = vmul.f32 %v2023, 1.442695
    %v2050 = vpow.pop %v2049
    %v2051 = vmul.f32 %v2024, 1.442695
    %v2052 = vpow.pop %v2051
    %v2053 = vmul.f32 %v2025, 1.442695
    %v2054 = vpow.pop %v2053
    %v2055 = vmul.f32 %v2026, 1.442695
    %v2056 = vpow.pop %v2055
    %v2057 = vmul.f32 %v2027, 1.442695
    %v2058 = vpow.pop %v2057
    %v2059 = vmul.f32 %v2028, 1.442695
    %v2060 = vpow.pop %v2059
    %2061 = vadd.xlane.f32.xlu0 %v2030
    %v2062 = vpop.xlane.xlu0 %2061
    %2063 = vadd.xlane.f32.xlu0 %v2032
    %v2064 = vpop.xlane.xlu0 %2063
    %2065 = vadd.xlane.f32.xlu0 %v2034
    %v2066 = vpop.xlane.xlu0 %2065
    %2067 = vadd.xlane.f32.xlu0 %v2036
    %v2068 = vpop.xlane.xlu0 %2067
    %2069 = vadd.xlane.f32.xlu0 %v2038
    %v2070 = vpop.xlane.xlu0 %2069
    %2071 = vadd.xlane.f32.xlu0 %v2040
    %v2072 = vpop.xlane.xlu0 %2071
    %2073 = vadd.xlane.f32.xlu0 %v2042
    %v2074 = vpop.xlane.xlu0 %2073
    %2075 = vadd.xlane.f32.xlu0 %v2044
    %v2076 = vpop.xlane.xlu0 %2075
    %2077 = vadd.xlane.f32.xlu0 %v2046
    %v2078 = vpop.xlane.xlu0 %2077
    %2079 = vadd.xlane.f32.xlu0 %v2048
    %v2080 = vpop.xlane.xlu0 %2079
    %2081 = vadd.xlane.f32.xlu0 %v2050
    %v2082 = vpop.xlane.xlu0 %2081
    %2083 = vadd.xlane.f32.xlu0 %v2052
    %v2084 = vpop.xlane.xlu0 %2083
    %2085 = vadd.xlane.f32.xlu0 %v2054
    %v2086 = vpop.xlane.xlu0 %2085
    %2087 = vadd.xlane.f32.xlu0 %v2056
    %v2088 = vpop.xlane.xlu0 %2087
    %2089 = vadd.xlane.f32.xlu0 %v2058
    %v2090 = vpop.xlane.xlu0 %2089
    %2091 = vadd.xlane.f32.xlu0 %v2060
    %v2092 = vpop.xlane.xlu0 %2091
    %v2093 = vlog2.pop %v2062
    %v2094 = vmul.f32 %v2093, 0.6931472
    %v2095 = vlog2.pop %v2064
    %v2096 = vmul.f32 %v2095, 0.6931472
    %v2097 = vlog2.pop %v2066
    %v2098 = vmul.f32 %v2097, 0.6931472
    %v2099 = vlog2.pop %v2068
    %v2100 = vmul.f32 %v2099, 0.6931472
    %v2101 = vlog2.pop %v2070
    %v2102 = vmul.f32 %v2101, 0.6931472
    %v2103 = vlog2.pop %v2072
    %v2104 = vmul.f32 %v2103, 0.6931472
    %v2105 = vlog2.pop %v2074
    %v2106 = vmul.f32 %v2105, 0.6931472
    %v2107 = vlog2.pop %v2076
    %v2108 = vmul.f32 %v2107, 0.6931472
    %v2109 = vlog2.pop %v2078
    %v2110 = vmul.f32 %v2109, 0.6931472
    %v2111 = vlog2.pop %v2080
    %v2112 = vmul.f32 %v2111, 0.6931472
    %v2113 = vlog2.pop %v2082
    %v2114 = vmul.f32 %v2113, 0.6931472
    %v2115 = vlog2.pop %v2084
    %v2116 = vmul.f32 %v2115, 0.6931472
    %v2117 = vlog2.pop %v2086
    %v2118 = vmul.f32 %v2117, 0.6931472
    %v2119 = vlog2.pop %v2088
    %v2120 = vmul.f32 %v2119, 0.6931472
    %v2121 = vlog2.pop %v2090
    %v2122 = vmul.f32 %v2121, 0.6931472
    %v2123 = vlog2.pop %v2092
    %v2124 = vmul.f32 %v2123, 0.6931472
    %v2125 = vsub.f32 %v2013, %v2094
    %v2126 = vsub.f32 %v2014, %v2096
    %v2127 = vsub.f32 %v2015, %v2098
    %v2128 = vsub.f32 %v2016, %v2100
    %v2129 = vsub.f32 %v2017, %v2102
    %v2130 = vsub.f32 %v2018, %v2104
    %v2131 = vsub.f32 %v2019, %v2106
    %v2132 = vsub.f32 %v2020, %v2108
    %v2133 = vsub.f32 %v2021, %v2110
    %v2134 = vsub.f32 %v2022, %v2112
    %v2135 = vsub.f32 %v2023, %v2114
    %v2136 = vsub.f32 %v2024, %v2116
    %v2137 = vsub.f32 %v2025, %v2118
    %v2138 = vsub.f32 %v2026, %v2120
    %v2139 = vsub.f32 %v2027, %v2122
    %v2140 = vsub.f32 %v2028, %v2124
    %v2141 = vsel %vm1964, %v2125, 0.0
    %v2142 = vsel %vm1964, %v2126, 0.0
    %v2143 = vsel %vm1964, %v2127, 0.0
    %v2144 = vsel %vm1964, %v2128, 0.0
    %v2145 = vsel %vm1964, %v2129, 0.0
    %v2146 = vsel %vm1964, %v2130, 0.0
    %v2147 = vsel %vm1964, %v2131, 0.0
    %v2148 = vsel %vm1964, %v2132, 0.0
    %v2149 = vsel %vm1964, %v2133, 0.0
    %v2150 = vsel %vm1964, %v2134, 0.0
    %v2151 = vsel %vm1964, %v2135, 0.0
    %v2152 = vsel %vm1964, %v2136, 0.0
    %v2153 = vsel %vm1964, %v2137, 0.0
    %v2154 = vsel %vm1964, %v2138, 0.0
    %v2155 = vsel %vm1964, %v2139, 0.0
    %v2156 = vsel %vm1964, %v2140, 0.0
    %2157 = vst [vmem:[#allocation10] sm:$0xff] %v2141
    %2158 = vst [vmem:[#allocation10 + $0x8] sm:$0xff] %v2142
    %2159 = vst [vmem:[#allocation10 + $0x10] sm:$0xff] %v2143
    %2160 = vst [vmem:[#allocation10 + $0x18] sm:$0xff] %v2144
    %2161 = vst [vmem:[#allocation10 + $0x20] sm:$0xff] %v2145
    %2162 = vst [vmem:[#allocation10 + $0x28] sm:$0xff] %v2146
    %2163 = vst [vmem:[#allocation10 + $0x30] sm:$0xff] %v2147
    %2164 = vst [vmem:[#allocation10 + $0x38] sm:$0xff] %v2148
    %2165 = vst [vmem:[#allocation10 + $0x40] sm:$0xff] %v2149
    %2166 = vst [vmem:[#allocation10 + $0x48] sm:$0xff] %v2150
    %2167 = vst [vmem:[#allocation10 + $0x50] sm:$0xff] %v2151
    %2168 = vst [vmem:[#allocation10 + $0x58] sm:$0xff] %v2152
    %2169 = vst [vmem:[#allocation10 + $0x60] sm:$0xff] %v2153
    %2170 = vst [vmem:[#allocation10 + $0x68] sm:$0xff] %v2154
    %2171 = vst [vmem:[#allocation10 + $0x70] sm:$0xff] %v2155
    %2172 = vst [vmem:[#allocation10 + $0x78] sm:$0xff] %v2156
    // Predicated region
    $region38: #{tpu_custom_call.1} parent=1 // pred_check
      _
    $region39: #{tpu_custom_call.1} parent=1 // pred_check_branch
      %2174 = sbr.rel (0) target = $region41
    $region40: #{tpu_custom_call.1} parent=1 // pred_region
      %s2176 = ssub.s32 2048, 2048
      %2177 = vsyncadd [#allocation4], %s2176
      %s2178 = sshll.u32 [#allocation10], 4
      %s2179 = int_to_ptr.vmem [resolvable:$true] %s2178
      %2184 = dma.vmem_to_hbm [thread:$0]  %s2179, 2048, %s5, [#allocation4], 128, 128, 8
    $region41: #{tpu_custom_call.1} parent=1 // pred_fallthru
      _
    // Predicated region
    $region42: #{tpu_custom_call.1} parent=1 // pred_check
      _
    $region43: #{tpu_custom_call.1} parent=1 // pred_check_branch
      %2186 = sbr.rel (0) target = $region45
    $region44: #{tpu_custom_call.1} parent=1 // pred_region
      %2187 = dma.done [#allocation4], 2048
    $region45: #{tpu_custom_call.1} parent=1 // pred_fallthru
      _
    %2188 = vsyncpa [#allocation3], 1
    %2189 = vsyncpa [#allocation6], 1
    %2190 = vsyncpa [#allocation9], 1
    %2191 = vsyncpa [#allocation4], 1

</llo_original>
